<compile_context>
chip_gen: v7x
topology: tpu7x:2x2x1
jax: 0.10.0
libtpu: 0.0.40
codegen_flags: <defaults>
</compile_context>

<pallas_src>
import functools
import math

import jax
import jax.numpy as jnp
from jax.experimental import pallas as pl
from jax.experimental.pallas import tpu as pltpu


# ----------------------------------------------------------------------------
# Fused kernel: (dropout=identity) + add + dual LayerNorm + attention + MLP.
# One grid step per block of Bt batch elements; rows flattened to (M=Bt*S, D).
# ----------------------------------------------------------------------------
def parallel_block_kernel(h1_ref, h2_ref, res_ref,
                          ln1w_ref, ln1b_ref, ln2w_ref, ln2b_ref,
                          wqkv_ref, bqkv_ref, wo_ref, bo_ref,
                          w1_ref, b1_ref, w2_ref, b2_ref,
                          attn_out_ref, mlp_out_ref, res_out_ref,
                          *, n_head, eps):
    f32 = jnp.float32
    bf16 = jnp.bfloat16
    Bt, S, D = h1_ref.shape
    M = Bt * S
    hd = D // n_head

    # ---- fused dropout(identity) + add + dual LayerNorm (parallel residual) ----
    # Flatten (Bt, S, D) -> (M, D): pure leading-dim merge, no lane relayout.
    resid = (res_ref[...].reshape(M, D).astype(f32)
             + h1_ref[...].reshape(M, D).astype(f32)
             + h2_ref[...].reshape(M, D).astype(f32))
    res_out_ref[...] = resid.reshape(Bt, S, D).astype(res_out_ref.dtype)

    mean = jnp.mean(resid, axis=-1, keepdims=True)
    xc = resid - mean
    var = jnp.mean(xc * xc, axis=-1, keepdims=True)
    xn = xc * jax.lax.rsqrt(var + eps)
    x1 = (xn * ln1w_ref[...] + ln1b_ref[...]).astype(bf16)   # attention input
    x2 = (xn * ln2w_ref[...] + ln2b_ref[...]).astype(bf16)   # MLP input

    # ---- attention branch ------------------------------------------------------
    # Single QKV matmul over all M rows (bf16 operands, f32 accumulation).
    qkv = jnp.dot(x1, wqkv_ref[...], preferred_element_type=f32) + bqkv_ref[...]
    scale = 1.0 / math.sqrt(hd)
    q = (qkv[:, 0 * D:1 * D] * scale).astype(bf16)   # fold softmax scale into Q
    k = qkv[:, 1 * D:2 * D].astype(bf16)
    v = qkv[:, 2 * D:3 * D].astype(bf16)

    # Per-(batch-in-block, head) attention core via static 2D slices — no stacks,
    # no (H,S,D) intermediate. Score matmul contracts the last dim of both
    # operands (MXU-native transposed-RHS form, no XLU transpose of K).
    ctx_rows = []
    for b in range(Bt):
        r0 = b * S
        head_ctx = []
        for h in range(n_head):
            c0 = h * hd
            qbh = q[r0:r0 + S, c0:c0 + hd]
            kbh = k[r0:r0 + S, c0:c0 + hd]
            vbh = v[r0:r0 + S, c0:c0 + hd]
            s_bh = jax.lax.dot_general(qbh, kbh, (((1,), (1,)), ((), ())),
                                       preferred_element_type=f32)       # (S, S)
            s_bh = s_bh - jnp.max(s_bh, axis=-1, keepdims=True)
            p_bh = jnp.exp(s_bh)
            p_bh = p_bh * pl.reciprocal(jnp.sum(p_bh, axis=-1, keepdims=True),
                                        approx=True)
            ctx_bh = jnp.dot(p_bh.astype(bf16), vbh,
                             preferred_element_type=f32)                  # (S, hd)
            head_ctx.append(ctx_bh)
        ctx_rows.append(jnp.concatenate(head_ctx, axis=-1))               # (S, D)
    ctx = jnp.concatenate(ctx_rows, axis=0).astype(bf16)                   # (M, D)

    # Single output projection over all rows and all heads: (M,D) @ (D,D).
    attn = jnp.dot(ctx, wo_ref[...], preferred_element_type=f32) + bo_ref[...]
    attn_out_ref[...] = attn.reshape(Bt, S, D).astype(attn_out_ref.dtype)

    # ---- MLP branch: fc1 -> exact (erf) GELU -> fc2 ----------------------------
    hmid = jnp.dot(x2, w1_ref[...], preferred_element_type=f32) + b1_ref[...]
    hmid = 0.5 * hmid * (1.0 + jax.lax.erf(hmid * (1.0 / math.sqrt(2.0))))
    mlp = jnp.dot(hmid.astype(bf16), w2_ref[...],
                  preferred_element_type=f32) + b2_ref[...]
    mlp_out_ref[...] = mlp.reshape(Bt, S, D).astype(mlp_out_ref.dtype)


# ----------------------------------------------------------------------------
# One-time host-side parameter prep (hoisted out of the per-call wrapper):
# bf16 matmul weights, (1, N)-shaped f32 biases / LN params.
# ----------------------------------------------------------------------------
def prepare_params(params):
    f32, bf16 = jnp.float32, jnp.bfloat16
    D = params["wqkv"].shape[0]
    HID = params["w1"].shape[1]
    return dict(
        ln1_w=params["ln1_w"].reshape(1, D).astype(f32),
        ln1_b=params["ln1_b"].reshape(1, D).astype(f32),
        ln2_w=params["ln2_w"].reshape(1, D).astype(f32),
        ln2_b=params["ln2_b"].reshape(1, D).astype(f32),
        wqkv=params["wqkv"].astype(bf16),
        bqkv=params["bqkv"].reshape(1, 3 * D).astype(f32),
        wo=params["wo"].astype(bf16),
        bo=params["bo"].reshape(1, D).astype(f32),
        w1=params["w1"].astype(bf16),
        b1=params["b1"].reshape(1, HID).astype(f32),
        w2=params["w2"].astype(bf16),
        b2=params["b2"].reshape(1, D).astype(f32),
    )


def _pick_block_batch(batch, seq, target_rows=256):
    """Largest divisor of `batch` that gives ~target_rows flattened rows per step."""
    bt = min(batch, max(1, target_rows // max(seq, 1)))
    while batch % bt:
        bt -= 1
    return max(bt, 1)


def _vmem_limit_bytes():
    """Generation-aware VMEM budget: ~75% of physical, clamped to [32, 100] MiB."""
    mib = 1024 * 1024
    try:
        cap = getattr(pltpu.get_tpu_info(), "vmem_capacity_bytes", None)
    except Exception:
        cap = None
    if not cap:
        return 64 * mib
    return int(max(32 * mib, min(0.75 * cap, 100 * mib)))


# ----------------------------------------------------------------------------
# ParallelBlock forward (wrapper): exactly one op per call (the fused kernel).
# ----------------------------------------------------------------------------
def parallel_block(h1, h2, residual, prep, *, n_head, eps=1e-5, block_batch=None):
    if residual is None:
        residual = jnp.zeros_like(h1)
    B, S, D = h1.shape
    HID = prep["w1"].shape[1]
    assert D % n_head == 0, "n_embd must be divisible by n_head"

    Bt = block_batch if block_batch is not None else _pick_block_batch(B, S)
    assert B % Bt == 0
    nb = B // Bt

    act = pl.BlockSpec((Bt, S, D), lambda i: (i, 0, 0))

    def full(shape):  # whole-array block, constant index across the grid
        return pl.BlockSpec(shape, lambda i: (0,) * len(shape))

    out_shape = (
        jax.ShapeDtypeStruct((B, S, D), h1.dtype),        # attention branch out
        jax.ShapeDtypeStruct((B, S, D), h1.dtype),        # MLP branch out
        jax.ShapeDtypeStruct((B, S, D), residual.dtype),  # residual (aliased)
    )
    kernel = functools.partial(parallel_block_kernel, n_head=n_head, eps=eps)
    return pl.pallas_call(
        kernel,
        out_shape=out_shape,
        grid=(nb,),
        in_specs=[
            act, act, act,                                   # h1, h2, residual
            full((1, D)), full((1, D)), full((1, D)), full((1, D)),  # LN params
            full((D, 3 * D)), full((1, 3 * D)),              # wqkv (bf16), bqkv
            full((D, D)), full((1, D)),                      # wo (bf16), bo
            full((D, HID)), full((1, HID)),                  # w1 (bf16), b1
            full((HID, D)), full((1, D)),                    # w2 (bf16), b2
        ],
        out_specs=(act, act, act),
        input_output_aliases={2: 2},                         # residual in -> out
        compiler_params=pltpu.CompilerParams(
            dimension_semantics=("parallel",),
            vmem_limit_bytes=_vmem_limit_bytes(),
        ),
    )(h1, h2, residual,
      prep["ln1_w"], prep["ln1_b"], prep["ln2_w"], prep["ln2_b"],
      prep["wqkv"], prep["bqkv"], prep["wo"], prep["bo"],
      prep["w1"], prep["b1"], prep["w2"], prep["b2"])


# ----------------------------------------------------------------------------
# Pure-JAX reference (f32) for a sanity check
# ----------------------------------------------------------------------------
def reference(h1, h2, residual, p, *, n_head, eps=1e-5):
    hi = jax.lax.Precision.HIGHEST
    resid = residual + h1 + h2

    def ln(x, w, b):
        m = x.mean(-1, keepdims=True)
        v = ((x - m) ** 2).mean(-1, keepdims=True)
        return (x - m) / jnp.sqrt(v + eps) * w + b

    x1 = ln(resid, p["ln1_w"], p["ln1_b"])
    x2 = ln(resid, p["ln2_w"], p["ln2_b"])
    B, S, D = x1.shape
    hd = D // n_head
    qkv = jnp.dot(x1, p["wqkv"], precision=hi) + p["bqkv"]
    q, k, v = jnp.split(qkv, 3, axis=-1)
    q = q.reshape(B, S, n_head, hd)
    k = k.reshape(B, S, n_head, hd)
    v = v.reshape(B, S, n_head, hd)
    s = jnp.einsum("bqhd,bkhd->bhqk", q, k, precision=hi) / jnp.sqrt(float(hd))
    pa = jax.nn.softmax(s, axis=-1)
    ctx = jnp.einsum("bhqk,bkhd->bqhd", pa, v, precision=hi).reshape(B, S, D)
    attn_out = jnp.dot(ctx, p["wo"], precision=hi) + p["bo"]
    hmid = jnp.dot(x2, p["w1"], precision=hi) + p["b1"]
    hmid = 0.5 * hmid * (1.0 + jax.lax.erf(hmid / jnp.sqrt(2.0)))
    mlp_out = jnp.dot(hmid, p["w2"], precision=hi) + p["b2"]
    return attn_out, mlp_out, resid


if __name__ == "__main__":
    # config: n_embd=32, n_head=4 (head_dim=8), n_inner=128, gelu MLP, LayerNorm
    B, S, D, H, HID = 2, 8, 32, 4, 128
    key = jax.random.PRNGKey(0)
    ks = jax.random.split(key, 16)

    h1 = jax.random.normal(ks[0], (B, S, D), jnp.float32)
    h2 = jax.random.normal(ks[1], (B, S, D), jnp.float32)
    residual = jax.random.normal(ks[2], (B, S, D), jnp.float32)

    params = {
        "ln1_w": 1.0 + 0.02 * jax.random.normal(ks[3], (D,), jnp.float32),
        "ln1_b": 0.02 * jax.random.normal(ks[4], (D,), jnp.float32),
        "ln2_w": 1.0 + 0.02 * jax.random.normal(ks[5], (D,), jnp.float32),
        "ln2_b": 0.02 * jax.random.normal(ks[6], (D,), jnp.float32),
        "wqkv": 0.05 * jax.random.normal(ks[7], (D, 3 * D), jnp.float32),
        "bqkv": 0.02 * jax.random.normal(ks[8], (3 * D,), jnp.float32),
        "wo": 0.05 * jax.random.normal(ks[9], (D, D), jnp.float32),
        "bo": 0.02 * jax.random.normal(ks[10], (D,), jnp.float32),
        "w1": 0.05 * jax.random.normal(ks[11], (D, HID), jnp.float32),
        "b1": 0.02 * jax.random.normal(ks[12], (HID,), jnp.float32),
        "w2": 0.05 * jax.random.normal(ks[13], (HID, D), jnp.float32),
        "b2": 0.02 * jax.random.normal(ks[14], (D,), jnp.float32),
    }

    # Reference first (residual buffer may be aliased/donated by the fused kernel).
    r1, r2, rr = reference(h1, h2, residual, params, n_head=H)
    jax.block_until_ready((r1, r2, rr))

    prep = prepare_params(params)          # one-time bf16 weight cast / reshapes
    out1, out2, resid = parallel_block(h1, h2, residual, prep, n_head=H)
    jax.block_until_ready((out1, out2, resid))

    # bf16 MXU operands + approx reciprocal -> slightly looser tolerance than f32.
    assert jnp.allclose(out1, r1, atol=2e-2, rtol=2e-2)
    assert jnp.allclose(out2, r2, atol=2e-2, rtol=2e-2)
    assert jnp.allclose(resid, rr, atol=2e-2, rtol=2e-2)

    print("KERNEL_OK")
</pallas_src>

<mosaic_0001>
module attributes {stable_mosaic.version = 11 : i64} {
  func.func @parallel_block_kernel(%arg0: i32, %arg1: memref<2x8x32xf32, #tpu.memory_space<vmem>>, %arg2: memref<2x8x32xf32, #tpu.memory_space<vmem>>, %arg3: memref<2x8x32xf32, #tpu.memory_space<vmem>>, %arg4: memref<1x32xf32, #tpu.memory_space<vmem>>, %arg5: memref<1x32xf32, #tpu.memory_space<vmem>>, %arg6: memref<1x32xf32, #tpu.memory_space<vmem>>, %arg7: memref<1x32xf32, #tpu.memory_space<vmem>>, %arg8: memref<32x96xbf16, #tpu.memory_space<vmem>>, %arg9: memref<1x96xf32, #tpu.memory_space<vmem>>, %arg10: memref<32x32xbf16, #tpu.memory_space<vmem>>, %arg11: memref<1x32xf32, #tpu.memory_space<vmem>>, %arg12: memref<32x128xbf16, #tpu.memory_space<vmem>>, %arg13: memref<1x128xf32, #tpu.memory_space<vmem>>, %arg14: memref<128x32xbf16, #tpu.memory_space<vmem>>, %arg15: memref<1x32xf32, #tpu.memory_space<vmem>>, %arg16: memref<2x8x32xf32, #tpu.memory_space<vmem>>, %arg17: memref<2x8x32xf32, #tpu.memory_space<vmem>>, %arg18: memref<2x8x32xf32, #tpu.memory_space<vmem>>) attributes {dimension_semantics = [#tpu.dimension_semantics<parallel>], iteration_bounds = array<i64: 1>, scalar_prefetch = 0 : i64, scratch_operands = 0 : i64, tpu.core_type = #tpu.core_type<tc>, window_params = [{transform_indices = @transform_0, window_bounds = array<i64: 2, 8, 32>}, {transform_indices = @transform_1, window_bounds = array<i64: 2, 8, 32>}, {transform_indices = @transform_2, window_bounds = array<i64: 2, 8, 32>}, {pipeline_mode = #tpu.pipeline_mode<synchronous>, transform_indices = @transform_3, window_bounds = array<i64: 1, 32>}, {pipeline_mode = #tpu.pipeline_mode<synchronous>, transform_indices = @transform_4, window_bounds = array<i64: 1, 32>}, {pipeline_mode = #tpu.pipeline_mode<synchronous>, transform_indices = @transform_5, window_bounds = array<i64: 1, 32>}, {pipeline_mode = #tpu.pipeline_mode<synchronous>, transform_indices = @transform_6, window_bounds = array<i64: 1, 32>}, {pipeline_mode = #tpu.pipeline_mode<synchronous>, transform_indices = @transform_7, window_bounds = array<i64: 32, 96>}, {pipeline_mode = #tpu.pipeline_mode<synchronous>, transform_indices = @transform_8, window_bounds = array<i64: 1, 96>}, {pipeline_mode = #tpu.pipeline_mode<synchronous>, transform_indices = @transform_9, window_bounds = array<i64: 32, 32>}, {pipeline_mode = #tpu.pipeline_mode<synchronous>, transform_indices = @transform_10, window_bounds = array<i64: 1, 32>}, {pipeline_mode = #tpu.pipeline_mode<synchronous>, transform_indices = @transform_11, window_bounds = array<i64: 32, 128>}, {pipeline_mode = #tpu.pipeline_mode<synchronous>, transform_indices = @transform_12, window_bounds = array<i64: 1, 128>}, {pipeline_mode = #tpu.pipeline_mode<synchronous>, transform_indices = @transform_13, window_bounds = array<i64: 128, 32>}, {pipeline_mode = #tpu.pipeline_mode<synchronous>, transform_indices = @transform_14, window_bounds = array<i64: 1, 32>}, {transform_indices = @transform_15, window_bounds = array<i64: 2, 8, 32>}, {transform_indices = @transform_16, window_bounds = array<i64: 2, 8, 32>}, {transform_indices = @transform_17, window_bounds = array<i64: 2, 8, 32>}]} {
    %c0 = arith.constant 0 : index
    %c0_0 = arith.constant 0 : index
    %c0_1 = arith.constant 0 : index
    %0 = vector.load %arg3[%c0, %c0_0, %c0_1] : memref<2x8x32xf32, #tpu.memory_space<vmem>>, vector<2x8x32xf32>
    %1 = vector.shape_cast %0 : vector<2x8x32xf32> to vector<16x32xf32>
    %c0_2 = arith.constant 0 : index
    %c0_3 = arith.constant 0 : index
    %c0_4 = arith.constant 0 : index
    %2 = vector.load %arg1[%c0_2, %c0_3, %c0_4] : memref<2x8x32xf32, #tpu.memory_space<vmem>>, vector<2x8x32xf32>
    %3 = vector.shape_cast %2 : vector<2x8x32xf32> to vector<16x32xf32>
    %4 = arith.addf %1, %3 : vector<16x32xf32>
    %c0_5 = arith.constant 0 : index
    %c0_6 = arith.constant 0 : index
    %c0_7 = arith.constant 0 : index
    %5 = vector.load %arg2[%c0_5, %c0_6, %c0_7] : memref<2x8x32xf32, #tpu.memory_space<vmem>>, vector<2x8x32xf32>
    %6 = vector.shape_cast %5 : vector<2x8x32xf32> to vector<16x32xf32>
    %7 = arith.addf %4, %6 : vector<16x32xf32>
    %8 = vector.shape_cast %7 : vector<16x32xf32> to vector<2x8x32xf32>
    %c0_8 = arith.constant 0 : index
    %c0_9 = arith.constant 0 : index
    %c0_10 = arith.constant 0 : index
    %9 = vector.load %arg18[%c0_8, %c0_9, %c0_10] : memref<2x8x32xf32, #tpu.memory_space<vmem>>, vector<2x8x32xf32>
    tpu.vector_store %arg18[%c0_8, %c0_9, %c0_10], %8 {strides = array<i32>} : memref<2x8x32xf32, #tpu.memory_space<vmem>>, vector<2x8x32xf32>,
    %cst = arith.constant dense<0.000000e+00> : vector<16xf32>
    %10 = vector.multi_reduction <add>, %7, %cst [1] : vector<16x32xf32> to vector<16xf32>
    %11 = vector.shape_cast %10 : vector<16xf32> to vector<16x1xf32>
    %cst_11 = arith.constant 3.200000e+01 : f32
    %12 = vector.broadcast %cst_11 : f32 to vector<16x1xf32>
    %13 = arith.divf %11, %12 : vector<16x1xf32>
    %14 = vector.broadcast %13 : vector<16x1xf32> to vector<16x32xf32>
    %15 = arith.subf %7, %14 : vector<16x32xf32>
    %16 = arith.mulf %15, %15 : vector<16x32xf32>
    %cst_12 = arith.constant dense<0.000000e+00> : vector<16xf32>
    %17 = vector.multi_reduction <add>, %16, %cst_12 [1] : vector<16x32xf32> to vector<16xf32>
    %18 = vector.shape_cast %17 : vector<16xf32> to vector<16x1xf32>
    %cst_13 = arith.constant 3.200000e+01 : f32
    %19 = vector.broadcast %cst_13 : f32 to vector<16x1xf32>
    %20 = arith.divf %18, %19 : vector<16x1xf32>
    %cst_14 = arith.constant 9.99999974E-6 : f32
    %21 = vector.broadcast %cst_14 : f32 to vector<16x1xf32>
    %22 = arith.addf %20, %21 : vector<16x1xf32>
    %23 = math.rsqrt %22 : vector<16x1xf32>
    %24 = vector.broadcast %23 : vector<16x1xf32> to vector<16x32xf32>
    %25 = arith.mulf %15, %24 : vector<16x32xf32>
    %c0_15 = arith.constant 0 : index
    %c0_16 = arith.constant 0 : index
    %26 = vector.load %arg4[%c0_15, %c0_16] : memref<1x32xf32, #tpu.memory_space<vmem>>, vector<1x32xf32>
    %27 = vector.broadcast %26 : vector<1x32xf32> to vector<16x32xf32>
    %28 = arith.mulf %25, %27 : vector<16x32xf32>
    %c0_17 = arith.constant 0 : index
    %c0_18 = arith.constant 0 : index
    %29 = vector.load %arg5[%c0_17, %c0_18] : memref<1x32xf32, #tpu.memory_space<vmem>>, vector<1x32xf32>
    %30 = vector.broadcast %29 : vector<1x32xf32> to vector<16x32xf32>
    %31 = arith.addf %28, %30 : vector<16x32xf32>
    %32 = arith.truncf %31 : vector<16x32xf32> to vector<16x32xbf16>
    %c0_19 = arith.constant 0 : index
    %c0_20 = arith.constant 0 : index
    %33 = vector.load %arg6[%c0_19, %c0_20] : memref<1x32xf32, #tpu.memory_space<vmem>>, vector<1x32xf32>
    %34 = vector.broadcast %33 : vector<1x32xf32> to vector<16x32xf32>
    %35 = arith.mulf %25, %34 : vector<16x32xf32>
    %c0_21 = arith.constant 0 : index
    %c0_22 = arith.constant 0 : index
    %36 = vector.load %arg7[%c0_21, %c0_22] : memref<1x32xf32, #tpu.memory_space<vmem>>, vector<1x32xf32>
    %37 = vector.broadcast %36 : vector<1x32xf32> to vector<16x32xf32>
    %38 = arith.addf %35, %37 : vector<16x32xf32>
    %39 = arith.truncf %38 : vector<16x32xf32> to vector<16x32xbf16>
    %c0_23 = arith.constant 0 : index
    %c0_24 = arith.constant 0 : index
    %40 = vector.load %arg8[%c0_23, %c0_24] : memref<32x96xbf16, #tpu.memory_space<vmem>>, vector<32x96xbf16>
    %cst_25 = arith.constant dense<0.000000e+00> : vector<16x96xf32>
    %41 = tpu.matmul %32, %40, %cst_25 {dimension_numbers = #tpu.dot_dimension_numbers<[1], [0], [0], [1], [0, 0, 1, 1], [], []>} : vector<16x32xbf16>, vector<32x96xbf16>, vector<16x96xf32> -> vector<16x96xf32>
    %c0_26 = arith.constant 0 : index
    %c0_27 = arith.constant 0 : index
    %42 = vector.load %arg9[%c0_26, %c0_27] : memref<1x96xf32, #tpu.memory_space<vmem>>, vector<1x96xf32>
    %43 = vector.broadcast %42 : vector<1x96xf32> to vector<16x96xf32>
    %44 = arith.addf %41, %43 : vector<16x96xf32>
    %45 = vector.extract_strided_slice %44 {offsets = [0, 0], sizes = [16, 32], strides = [1, 1]} : vector<16x96xf32> to vector<16x32xf32>
    %cst_28 = arith.constant 0.353553385 : f32
    %46 = vector.broadcast %cst_28 : f32 to vector<16x32xf32>
    %47 = arith.mulf %45, %46 : vector<16x32xf32>
    %48 = arith.truncf %47 : vector<16x32xf32> to vector<16x32xbf16>
    %49 = vector.extract_strided_slice %44 {offsets = [0, 32], sizes = [16, 32], strides = [1, 1]} : vector<16x96xf32> to vector<16x32xf32>
    %50 = arith.truncf %49 : vector<16x32xf32> to vector<16x32xbf16>
    %51 = vector.extract_strided_slice %44 {offsets = [0, 64], sizes = [16, 32], strides = [1, 1]} : vector<16x96xf32> to vector<16x32xf32>
    %52 = arith.truncf %51 : vector<16x32xf32> to vector<16x32xbf16>
    %53 = vector.extract_strided_slice %48 {offsets = [0, 0], sizes = [8, 8], strides = [1, 1]} : vector<16x32xbf16> to vector<8x8xbf16>
    %54 = vector.extract_strided_slice %50 {offsets = [0, 0], sizes = [8, 8], strides = [1, 1]} : vector<16x32xbf16> to vector<8x8xbf16>
    %55 = vector.extract_strided_slice %52 {offsets = [0, 0], sizes = [8, 8], strides = [1, 1]} : vector<16x32xbf16> to vector<8x8xbf16>
    %cst_29 = arith.constant dense<0.000000e+00> : vector<8x8xf32>
    %56 = tpu.matmul %53, %54, %cst_29 {dimension_numbers = #tpu.dot_dimension_numbers<[1], [1], [0], [0], [0, 0, 1, 0], [], []>} : vector<8x8xbf16>, vector<8x8xbf16>, vector<8x8xf32> -> vector<8x8xf32>
    %cst_30 = arith.constant dense<0xFF800000> : vector<8xf32>
    %57 = vector.multi_reduction <maximumf>, %56, %cst_30 [1] : vector<8x8xf32> to vector<8xf32>
    %58 = vector.shape_cast %57 : vector<8xf32> to vector<8x1xf32>
    %59 = vector.broadcast %58 : vector<8x1xf32> to vector<8x8xf32>
    %60 = arith.subf %56, %59 : vector<8x8xf32>
    %61 = math.exp %60 : vector<8x8xf32>
    %cst_31 = arith.constant dense<0.000000e+00> : vector<8xf32>
    %62 = vector.multi_reduction <add>, %61, %cst_31 [1] : vector<8x8xf32> to vector<8xf32>
    %63 = vector.shape_cast %62 : vector<8xf32> to vector<8x1xf32>
    %64 = tpu.reciprocal %63 {approx = true} : vector<8x1xf32> -> vector<8x1xf32>
    %65 = vector.broadcast %64 : vector<8x1xf32> to vector<8x8xf32>
    %66 = arith.mulf %61, %65 : vector<8x8xf32>
    %67 = arith.truncf %66 : vector<8x8xf32> to vector<8x8xbf16>
    %cst_32 = arith.constant dense<0.000000e+00> : vector<8x8xf32>
    %68 = tpu.matmul %67, %55, %cst_32 {dimension_numbers = #tpu.dot_dimension_numbers<[1], [0], [0], [1], [0, 0, 1, 1], [], []>} : vector<8x8xbf16>, vector<8x8xbf16>, vector<8x8xf32> -> vector<8x8xf32>
    %69 = vector.extract_strided_slice %48 {offsets = [0, 8], sizes = [8, 8], strides = [1, 1]} : vector<16x32xbf16> to vector<8x8xbf16>
    %70 = vector.extract_strided_slice %50 {offsets = [0, 8], sizes = [8, 8], strides = [1, 1]} : vector<16x32xbf16> to vector<8x8xbf16>
    %71 = vector.extract_strided_slice %52 {offsets = [0, 8], sizes = [8, 8], strides = [1, 1]} : vector<16x32xbf16> to vector<8x8xbf16>
    %cst_33 = arith.constant dense<0.000000e+00> : vector<8x8xf32>
    %72 = tpu.matmul %69, %70, %cst_33 {dimension_numbers = #tpu.dot_dimension_numbers<[1], [1], [0], [0], [0, 0, 1, 0], [], []>} : vector<8x8xbf16>, vector<8x8xbf16>, vector<8x8xf32> -> vector<8x8xf32>
    %cst_34 = arith.constant dense<0xFF800000> : vector<8xf32>
    %73 = vector.multi_reduction <maximumf>, %72, %cst_34 [1] : vector<8x8xf32> to vector<8xf32>
    %74 = vector.shape_cast %73 : vector<8xf32> to vector<8x1xf32>
    %75 = vector.broadcast %74 : vector<8x1xf32> to vector<8x8xf32>
    %76 = arith.subf %72, %75 : vector<8x8xf32>
    %77 = math.exp %76 : vector<8x8xf32>
    %cst_35 = arith.constant dense<0.000000e+00> : vector<8xf32>
    %78 = vector.multi_reduction <add>, %77, %cst_35 [1] : vector<8x8xf32> to vector<8xf32>
    %79 = vector.shape_cast %78 : vector<8xf32> to vector<8x1xf32>
    %80 = tpu.reciprocal %79 {approx = true} : vector<8x1xf32> -> vector<8x1xf32>
    %81 = vector.broadcast %80 : vector<8x1xf32> to vector<8x8xf32>
    %82 = arith.mulf %77, %81 : vector<8x8xf32>
    %83 = arith.truncf %82 : vector<8x8xf32> to vector<8x8xbf16>
    %cst_36 = arith.constant dense<0.000000e+00> : vector<8x8xf32>
    %84 = tpu.matmul %83, %71, %cst_36 {dimension_numbers = #tpu.dot_dimension_numbers<[1], [0], [0], [1], [0, 0, 1, 1], [], []>} : vector<8x8xbf16>, vector<8x8xbf16>, vector<8x8xf32> -> vector<8x8xf32>
    %85 = vector.extract_strided_slice %48 {offsets = [0, 16], sizes = [8, 8], strides = [1, 1]} : vector<16x32xbf16> to vector<8x8xbf16>
    %86 = vector.extract_strided_slice %50 {offsets = [0, 16], sizes = [8, 8], strides = [1, 1]} : vector<16x32xbf16> to vector<8x8xbf16>
    %87 = vector.extract_strided_slice %52 {offsets = [0, 16], sizes = [8, 8], strides = [1, 1]} : vector<16x32xbf16> to vector<8x8xbf16>
    %cst_37 = arith.constant dense<0.000000e+00> : vector<8x8xf32>
    %88 = tpu.matmul %85, %86, %cst_37 {dimension_numbers = #tpu.dot_dimension_numbers<[1], [1], [0], [0], [0, 0, 1, 0], [], []>} : vector<8x8xbf16>, vector<8x8xbf16>, vector<8x8xf32> -> vector<8x8xf32>
    %cst_38 = arith.constant dense<0xFF800000> : vector<8xf32>
    %89 = vector.multi_reduction <maximumf>, %88, %cst_38 [1] : vector<8x8xf32> to vector<8xf32>
    %90 = vector.shape_cast %89 : vector<8xf32> to vector<8x1xf32>
    %91 = vector.broadcast %90 : vector<8x1xf32> to vector<8x8xf32>
    %92 = arith.subf %88, %91 : vector<8x8xf32>
    %93 = math.exp %92 : vector<8x8xf32>
    %cst_39 = arith.constant dense<0.000000e+00> : vector<8xf32>
    %94 = vector.multi_reduction <add>, %93, %cst_39 [1] : vector<8x8xf32> to vector<8xf32>
    %95 = vector.shape_cast %94 : vector<8xf32> to vector<8x1xf32>
    %96 = tpu.reciprocal %95 {approx = true} : vector<8x1xf32> -> vector<8x1xf32>
    %97 = vector.broadcast %96 : vector<8x1xf32> to vector<8x8xf32>
    %98 = arith.mulf %93, %97 : vector<8x8xf32>
    %99 = arith.truncf %98 : vector<8x8xf32> to vector<8x8xbf16>
    %cst_40 = arith.constant dense<0.000000e+00> : vector<8x8xf32>
    %100 = tpu.matmul %99, %87, %cst_40 {dimension_numbers = #tpu.dot_dimension_numbers<[1], [0], [0], [1], [0, 0, 1, 1], [], []>} : vector<8x8xbf16>, vector<8x8xbf16>, vector<8x8xf32> -> vector<8x8xf32>
    %101 = vector.extract_strided_slice %48 {offsets = [0, 24], sizes = [8, 8], strides = [1, 1]} : vector<16x32xbf16> to vector<8x8xbf16>
    %102 = vector.extract_strided_slice %50 {offsets = [0, 24], sizes = [8, 8], strides = [1, 1]} : vector<16x32xbf16> to vector<8x8xbf16>
    %103 = vector.extract_strided_slice %52 {offsets = [0, 24], sizes = [8, 8], strides = [1, 1]} : vector<16x32xbf16> to vector<8x8xbf16>
    %cst_41 = arith.constant dense<0.000000e+00> : vector<8x8xf32>
    %104 = tpu.matmul %101, %102, %cst_41 {dimension_numbers = #tpu.dot_dimension_numbers<[1], [1], [0], [0], [0, 0, 1, 0], [], []>} : vector<8x8xbf16>, vector<8x8xbf16>, vector<8x8xf32> -> vector<8x8xf32>
    %cst_42 = arith.constant dense<0xFF800000> : vector<8xf32>
    %105 = vector.multi_reduction <maximumf>, %104, %cst_42 [1] : vector<8x8xf32> to vector<8xf32>
    %106 = vector.shape_cast %105 : vector<8xf32> to vector<8x1xf32>
    %107 = vector.broadcast %106 : vector<8x1xf32> to vector<8x8xf32>
    %108 = arith.subf %104, %107 : vector<8x8xf32>
    %109 = math.exp %108 : vector<8x8xf32>
    %cst_43 = arith.constant dense<0.000000e+00> : vector<8xf32>
    %110 = vector.multi_reduction <add>, %109, %cst_43 [1] : vector<8x8xf32> to vector<8xf32>
    %111 = vector.shape_cast %110 : vector<8xf32> to vector<8x1xf32>
    %112 = tpu.reciprocal %111 {approx = true} : vector<8x1xf32> -> vector<8x1xf32>
    %113 = vector.broadcast %112 : vector<8x1xf32> to vector<8x8xf32>
    %114 = arith.mulf %109, %113 : vector<8x8xf32>
    %115 = arith.truncf %114 : vector<8x8xf32> to vector<8x8xbf16>
    %cst_44 = arith.constant dense<0.000000e+00> : vector<8x8xf32>
    %116 = tpu.matmul %115, %103, %cst_44 {dimension_numbers = #tpu.dot_dimension_numbers<[1], [0], [0], [1], [0, 0, 1, 1], [], []>} : vector<8x8xbf16>, vector<8x8xbf16>, vector<8x8xf32> -> vector<8x8xf32>
    %117 = tpu.concatenate %68, %84, %100, %116 in 1 : vector<8x8xf32>, vector<8x8xf32>, vector<8x8xf32>, vector<8x8xf32> -> vector<8x32xf32>
    %118 = vector.extract_strided_slice %48 {offsets = [8, 0], sizes = [8, 8], strides = [1, 1]} : vector<16x32xbf16> to vector<8x8xbf16>
    %119 = vector.extract_strided_slice %50 {offsets = [8, 0], sizes = [8, 8], strides = [1, 1]} : vector<16x32xbf16> to vector<8x8xbf16>
    %120 = vector.extract_strided_slice %52 {offsets = [8, 0], sizes = [8, 8], strides = [1, 1]} : vector<16x32xbf16> to vector<8x8xbf16>
    %cst_45 = arith.constant dense<0.000000e+00> : vector<8x8xf32>
    %121 = tpu.matmul %118, %119, %cst_45 {dimension_numbers = #tpu.dot_dimension_numbers<[1], [1], [0], [0], [0, 0, 1, 0], [], []>} : vector<8x8xbf16>, vector<8x8xbf16>, vector<8x8xf32> -> vector<8x8xf32>
    %cst_46 = arith.constant dense<0xFF800000> : vector<8xf32>
    %122 = vector.multi_reduction <maximumf>, %121, %cst_46 [1] : vector<8x8xf32> to vector<8xf32>
    %123 = vector.shape_cast %122 : vector<8xf32> to vector<8x1xf32>
    %124 = vector.broadcast %123 : vector<8x1xf32> to vector<8x8xf32>
    %125 = arith.subf %121, %124 : vector<8x8xf32>
    %126 = math.exp %125 : vector<8x8xf32>
    %cst_47 = arith.constant dense<0.000000e+00> : vector<8xf32>
    %127 = vector.multi_reduction <add>, %126, %cst_47 [1] : vector<8x8xf32> to vector<8xf32>
    %128 = vector.shape_cast %127 : vector<8xf32> to vector<8x1xf32>
    %129 = tpu.reciprocal %128 {approx = true} : vector<8x1xf32> -> vector<8x1xf32>
    %130 = vector.broadcast %129 : vector<8x1xf32> to vector<8x8xf32>
    %131 = arith.mulf %126, %130 : vector<8x8xf32>
    %132 = arith.truncf %131 : vector<8x8xf32> to vector<8x8xbf16>
    %cst_48 = arith.constant dense<0.000000e+00> : vector<8x8xf32>
    %133 = tpu.matmul %132, %120, %cst_48 {dimension_numbers = #tpu.dot_dimension_numbers<[1], [0], [0], [1], [0, 0, 1, 1], [], []>} : vector<8x8xbf16>, vector<8x8xbf16>, vector<8x8xf32> -> vector<8x8xf32>
    %134 = vector.extract_strided_slice %48 {offsets = [8, 8], sizes = [8, 8], strides = [1, 1]} : vector<16x32xbf16> to vector<8x8xbf16>
    %135 = vector.extract_strided_slice %50 {offsets = [8, 8], sizes = [8, 8], strides = [1, 1]} : vector<16x32xbf16> to vector<8x8xbf16>
    %136 = vector.extract_strided_slice %52 {offsets = [8, 8], sizes = [8, 8], strides = [1, 1]} : vector<16x32xbf16> to vector<8x8xbf16>
    %cst_49 = arith.constant dense<0.000000e+00> : vector<8x8xf32>
    %137 = tpu.matmul %134, %135, %cst_49 {dimension_numbers = #tpu.dot_dimension_numbers<[1], [1], [0], [0], [0, 0, 1, 0], [], []>} : vector<8x8xbf16>, vector<8x8xbf16>, vector<8x8xf32> -> vector<8x8xf32>
    %cst_50 = arith.constant dense<0xFF800000> : vector<8xf32>
    %138 = vector.multi_reduction <maximumf>, %137, %cst_50 [1] : vector<8x8xf32> to vector<8xf32>
    %139 = vector.shape_cast %138 : vector<8xf32> to vector<8x1xf32>
    %140 = vector.broadcast %139 : vector<8x1xf32> to vector<8x8xf32>
    %141 = arith.subf %137, %140 : vector<8x8xf32>
    %142 = math.exp %141 : vector<8x8xf32>
    %cst_51 = arith.constant dense<0.000000e+00> : vector<8xf32>
    %143 = vector.multi_reduction <add>, %142, %cst_51 [1] : vector<8x8xf32> to vector<8xf32>
    %144 = vector.shape_cast %143 : vector<8xf32> to vector<8x1xf32>
    %145 = tpu.reciprocal %144 {approx = true} : vector<8x1xf32> -> vector<8x1xf32>
    %146 = vector.broadcast %145 : vector<8x1xf32> to vector<8x8xf32>
    %147 = arith.mulf %142, %146 : vector<8x8xf32>
    %148 = arith.truncf %147 : vector<8x8xf32> to vector<8x8xbf16>
    %cst_52 = arith.constant dense<0.000000e+00> : vector<8x8xf32>
    %149 = tpu.matmul %148, %136, %cst_52 {dimension_numbers = #tpu.dot_dimension_numbers<[1], [0], [0], [1], [0, 0, 1, 1], [], []>} : vector<8x8xbf16>, vector<8x8xbf16>, vector<8x8xf32> -> vector<8x8xf32>
    %150 = vector.extract_strided_slice %48 {offsets = [8, 16], sizes = [8, 8], strides = [1, 1]} : vector<16x32xbf16> to vector<8x8xbf16>
    %151 = vector.extract_strided_slice %50 {offsets = [8, 16], sizes = [8, 8], strides = [1, 1]} : vector<16x32xbf16> to vector<8x8xbf16>
    %152 = vector.extract_strided_slice %52 {offsets = [8, 16], sizes = [8, 8], strides = [1, 1]} : vector<16x32xbf16> to vector<8x8xbf16>
    %cst_53 = arith.constant dense<0.000000e+00> : vector<8x8xf32>
    %153 = tpu.matmul %150, %151, %cst_53 {dimension_numbers = #tpu.dot_dimension_numbers<[1], [1], [0], [0], [0, 0, 1, 0], [], []>} : vector<8x8xbf16>, vector<8x8xbf16>, vector<8x8xf32> -> vector<8x8xf32>
    %cst_54 = arith.constant dense<0xFF800000> : vector<8xf32>
    %154 = vector.multi_reduction <maximumf>, %153, %cst_54 [1] : vector<8x8xf32> to vector<8xf32>
    %155 = vector.shape_cast %154 : vector<8xf32> to vector<8x1xf32>
    %156 = vector.broadcast %155 : vector<8x1xf32> to vector<8x8xf32>
    %157 = arith.subf %153, %156 : vector<8x8xf32>
    %158 = math.exp %157 : vector<8x8xf32>
    %cst_55 = arith.constant dense<0.000000e+00> : vector<8xf32>
    %159 = vector.multi_reduction <add>, %158, %cst_55 [1] : vector<8x8xf32> to vector<8xf32>
    %160 = vector.shape_cast %159 : vector<8xf32> to vector<8x1xf32>
    %161 = tpu.reciprocal %160 {approx = true} : vector<8x1xf32> -> vector<8x1xf32>
    %162 = vector.broadcast %161 : vector<8x1xf32> to vector<8x8xf32>
    %163 = arith.mulf %158, %162 : vector<8x8xf32>
    %164 = arith.truncf %163 : vector<8x8xf32> to vector<8x8xbf16>
    %cst_56 = arith.constant dense<0.000000e+00> : vector<8x8xf32>
    %165 = tpu.matmul %164, %152, %cst_56 {dimension_numbers = #tpu.dot_dimension_numbers<[1], [0], [0], [1], [0, 0, 1, 1], [], []>} : vector<8x8xbf16>, vector<8x8xbf16>, vector<8x8xf32> -> vector<8x8xf32>
    %166 = vector.extract_strided_slice %48 {offsets = [8, 24], sizes = [8, 8], strides = [1, 1]} : vector<16x32xbf16> to vector<8x8xbf16>
    %167 = vector.extract_strided_slice %50 {offsets = [8, 24], sizes = [8, 8], strides = [1, 1]} : vector<16x32xbf16> to vector<8x8xbf16>
    %168 = vector.extract_strided_slice %52 {offsets = [8, 24], sizes = [8, 8], strides = [1, 1]} : vector<16x32xbf16> to vector<8x8xbf16>
    %cst_57 = arith.constant dense<0.000000e+00> : vector<8x8xf32>
    %169 = tpu.matmul %166, %167, %cst_57 {dimension_numbers = #tpu.dot_dimension_numbers<[1], [1], [0], [0], [0, 0, 1, 0], [], []>} : vector<8x8xbf16>, vector<8x8xbf16>, vector<8x8xf32> -> vector<8x8xf32>
    %cst_58 = arith.constant dense<0xFF800000> : vector<8xf32>
    %170 = vector.multi_reduction <maximumf>, %169, %cst_58 [1] : vector<8x8xf32> to vector<8xf32>
    %171 = vector.shape_cast %170 : vector<8xf32> to vector<8x1xf32>
    %172 = vector.broadcast %171 : vector<8x1xf32> to vector<8x8xf32>
    %173 = arith.subf %169, %172 : vector<8x8xf32>
    %174 = math.exp %173 : vector<8x8xf32>
    %cst_59 = arith.constant dense<0.000000e+00> : vector<8xf32>
    %175 = vector.multi_reduction <add>, %174, %cst_59 [1] : vector<8x8xf32> to vector<8xf32>
    %176 = vector.shape_cast %175 : vector<8xf32> to vector<8x1xf32>
    %177 = tpu.reciprocal %176 {approx = true} : vector<8x1xf32> -> vector<8x1xf32>
    %178 = vector.broadcast %177 : vector<8x1xf32> to vector<8x8xf32>
    %179 = arith.mulf %174, %178 : vector<8x8xf32>
    %180 = arith.truncf %179 : vector<8x8xf32> to vector<8x8xbf16>
    %cst_60 = arith.constant dense<0.000000e+00> : vector<8x8xf32>
    %181 = tpu.matmul %180, %168, %cst_60 {dimension_numbers = #tpu.dot_dimension_numbers<[1], [0], [0], [1], [0, 0, 1, 1], [], []>} : vector<8x8xbf16>, vector<8x8xbf16>, vector<8x8xf32> -> vector<8x8xf32>
    %182 = tpu.concatenate %133, %149, %165, %181 in 1 : vector<8x8xf32>, vector<8x8xf32>, vector<8x8xf32>, vector<8x8xf32> -> vector<8x32xf32>
    %183 = tpu.concatenate %117, %182 in 0 : vector<8x32xf32>, vector<8x32xf32> -> vector<16x32xf32>
    %184 = arith.truncf %183 : vector<16x32xf32> to vector<16x32xbf16>
    %c0_61 = arith.constant 0 : index
    %c0_62 = arith.constant 0 : index
    %185 = vector.load %arg10[%c0_61, %c0_62] : memref<32x32xbf16, #tpu.memory_space<vmem>>, vector<32x32xbf16>
    %cst_63 = arith.constant dense<0.000000e+00> : vector<16x32xf32>
    %186 = tpu.matmul %184, %185, %cst_63 {dimension_numbers = #tpu.dot_dimension_numbers<[1], [0], [0], [1], [0, 0, 1, 1], [], []>} : vector<16x32xbf16>, vector<32x32xbf16>, vector<16x32xf32> -> vector<16x32xf32>
    %c0_64 = arith.constant 0 : index
    %c0_65 = arith.constant 0 : index
    %187 = vector.load %arg11[%c0_64, %c0_65] : memref<1x32xf32, #tpu.memory_space<vmem>>, vector<1x32xf32>
    %188 = vector.broadcast %187 : vector<1x32xf32> to vector<16x32xf32>
    %189 = arith.addf %186, %188 : vector<16x32xf32>
    %190 = vector.shape_cast %189 : vector<16x32xf32> to vector<2x8x32xf32>
    %c0_66 = arith.constant 0 : index
    %c0_67 = arith.constant 0 : index
    %c0_68 = arith.constant 0 : index
    %191 = vector.load %arg16[%c0_66, %c0_67, %c0_68] : memref<2x8x32xf32, #tpu.memory_space<vmem>>, vector<2x8x32xf32>
    tpu.vector_store %arg16[%c0_66, %c0_67, %c0_68], %190 {strides = array<i32>} : memref<2x8x32xf32, #tpu.memory_space<vmem>>, vector<2x8x32xf32>,
    %c0_69 = arith.constant 0 : index
    %c0_70 = arith.constant 0 : index
    %192 = vector.load %arg12[%c0_69, %c0_70] : memref<32x128xbf16, #tpu.memory_space<vmem>>, vector<32x128xbf16>
    %cst_71 = arith.constant dense<0.000000e+00> : vector<16x128xf32>
    %193 = tpu.matmul %39, %192, %cst_71 {dimension_numbers = #tpu.dot_dimension_numbers<[1], [0], [0], [1], [0, 0, 1, 1], [], []>} : vector<16x32xbf16>, vector<32x128xbf16>, vector<16x128xf32> -> vector<16x128xf32>
    %c0_72 = arith.constant 0 : index
    %c0_73 = arith.constant 0 : index
    %194 = vector.load %arg13[%c0_72, %c0_73] : memref<1x128xf32, #tpu.memory_space<vmem>>, vector<1x128xf32>
    %195 = vector.broadcast %194 : vector<1x128xf32> to vector<16x128xf32>
    %196 = arith.addf %193, %195 : vector<16x128xf32>
    %cst_74 = arith.constant 5.000000e-01 : f32
    %197 = vector.broadcast %cst_74 : f32 to vector<16x128xf32>
    %198 = arith.mulf %197, %196 : vector<16x128xf32>
    %cst_75 = arith.constant 0.707106769 : f32
    %199 = vector.broadcast %cst_75 : f32 to vector<16x128xf32>
    %200 = arith.mulf %196, %199 : vector<16x128xf32>
    %201 = math.erf %200 : vector<16x128xf32>
    %cst_76 = arith.constant 1.000000e+00 : f32
    %202 = vector.broadcast %cst_76 : f32 to vector<16x128xf32>
    %203 = arith.addf %202, %201 : vector<16x128xf32>
    %204 = arith.mulf %198, %203 : vector<16x128xf32>
    %205 = arith.truncf %204 : vector<16x128xf32> to vector<16x128xbf16>
    %c0_77 = arith.constant 0 : index
    %c0_78 = arith.constant 0 : index
    %206 = vector.load %arg14[%c0_77, %c0_78] : memref<128x32xbf16, #tpu.memory_space<vmem>>, vector<128x32xbf16>
    %cst_79 = arith.constant dense<0.000000e+00> : vector<16x32xf32>
    %207 = tpu.matmul %205, %206, %cst_79 {dimension_numbers = #tpu.dot_dimension_numbers<[1], [0], [0], [1], [0, 0, 1, 1], [], []>} : vector<16x128xbf16>, vector<128x32xbf16>, vector<16x32xf32> -> vector<16x32xf32>
    %c0_80 = arith.constant 0 : index
    %c0_81 = arith.constant 0 : index
    %208 = vector.load %arg15[%c0_80, %c0_81] : memref<1x32xf32, #tpu.memory_space<vmem>>, vector<1x32xf32>
    %209 = vector.broadcast %208 : vector<1x32xf32> to vector<16x32xf32>
    %210 = arith.addf %207, %209 : vector<16x32xf32>
    %211 = vector.shape_cast %210 : vector<16x32xf32> to vector<2x8x32xf32>
    %c0_82 = arith.constant 0 : index
    %c0_83 = arith.constant 0 : index
    %c0_84 = arith.constant 0 : index
    %212 = vector.load %arg17[%c0_82, %c0_83, %c0_84] : memref<2x8x32xf32, #tpu.memory_space<vmem>>, vector<2x8x32xf32>
    tpu.vector_store %arg17[%c0_82, %c0_83, %c0_84], %211 {strides = array<i32>} : memref<2x8x32xf32, #tpu.memory_space<vmem>>, vector<2x8x32xf32>,
    return
  }
  func.func @transform_0(%arg0: i32) -> (i32, i32, i32) {
    %c0_i32 = arith.constant 0 : i32
    %c0_i32_0 = arith.constant 0 : i32
    %c0_i32_1 = arith.constant 0 : i32
    return %arg0, %c0_i32, %c0_i32_0 : i32, i32, i32
  }
  func.func @transform_1(%arg0: i32) -> (i32, i32, i32) {
    %c0_i32 = arith.constant 0 : i32
    %c0_i32_0 = arith.constant 0 : i32
    %c0_i32_1 = arith.constant 0 : i32
    return %arg0, %c0_i32, %c0_i32_0 : i32, i32, i32
  }
  func.func @transform_2(%arg0: i32) -> (i32, i32, i32) {
    %c0_i32 = arith.constant 0 : i32
    %c0_i32_0 = arith.constant 0 : i32
    %c0_i32_1 = arith.constant 0 : i32
    return %arg0, %c0_i32, %c0_i32_0 : i32, i32, i32
  }
  func.func @transform_3(%arg0: i32) -> (i32, i32) {
    %c0_i32 = arith.constant 0 : i32
    %c0_i32_0 = arith.constant 0 : i32
    %c0_i32_1 = arith.constant 0 : i32
    return %c0_i32, %c0_i32_0 : i32, i32
  }
  func.func @transform_4(%arg0: i32) -> (i32, i32) {
    %c0_i32 = arith.constant 0 : i32
    %c0_i32_0 = arith.constant 0 : i32
    %c0_i32_1 = arith.constant 0 : i32
    return %c0_i32, %c0_i32_0 : i32, i32
  }
  func.func @transform_5(%arg0: i32) -> (i32, i32) {
    %c0_i32 = arith.constant 0 : i32
    %c0_i32_0 = arith.constant 0 : i32
    %c0_i32_1 = arith.constant 0 : i32
    return %c0_i32, %c0_i32_0 : i32, i32
  }
  func.func @transform_6(%arg0: i32) -> (i32, i32) {
    %c0_i32 = arith.constant 0 : i32
    %c0_i32_0 = arith.constant 0 : i32
    %c0_i32_1 = arith.constant 0 : i32
    return %c0_i32, %c0_i32_0 : i32, i32
  }
  func.func @transform_7(%arg0: i32) -> (i32, i32) {
    %c0_i32 = arith.constant 0 : i32
    %c0_i32_0 = arith.constant 0 : i32
    %c0_i32_1 = arith.constant 0 : i32
    return %c0_i32, %c0_i32_0 : i32, i32
  }
  func.func @transform_8(%arg0: i32) -> (i32, i32) {
    %c0_i32 = arith.constant 0 : i32
    %c0_i32_0 = arith.constant 0 : i32
    %c0_i32_1 = arith.constant 0 : i32
    return %c0_i32, %c0_i32_0 : i32, i32
  }
  func.func @transform_9(%arg0: i32) -> (i32, i32) {
    %c0_i32 = arith.constant 0 : i32
    %c0_i32_0 = arith.constant 0 : i32
    %c0_i32_1 = arith.constant 0 : i32
    return %c0_i32, %c0_i32_0 : i32, i32
  }
  func.func @transform_10(%arg0: i32) -> (i32, i32) {
    %c0_i32 = arith.constant 0 : i32
    %c0_i32_0 = arith.constant 0 : i32
    %c0_i32_1 = arith.constant 0 : i32
    return %c0_i32, %c0_i32_0 : i32, i32
  }
  func.func @transform_11(%arg0: i32) -> (i32, i32) {
    %c0_i32 = arith.constant 0 : i32
    %c0_i32_0 = arith.constant 0 : i32
    %c0_i32_1 = arith.constant 0 : i32
    return %c0_i32, %c0_i32_0 : i32, i32
  }
  func.func @transform_12(%arg0: i32) -> (i32, i32) {
    %c0_i32 = arith.constant 0 : i32
    %c0_i32_0 = arith.constant 0 : i32
    %c0_i32_1 = arith.constant 0 : i32
    return %c0_i32, %c0_i32_0 : i32, i32
  }
  func.func @transform_13(%arg0: i32) -> (i32, i32) {
    %c0_i32 = arith.constant 0 : i32
    %c0_i32_0 = arith.constant 0 : i32
    %c0_i32_1 = arith.constant 0 : i32
    return %c0_i32, %c0_i32_0 : i32, i32
  }
  func.func @transform_14(%arg0: i32) -> (i32, i32) {
    %c0_i32 = arith.constant 0 : i32
    %c0_i32_0 = arith.constant 0 : i32
    %c0_i32_1 = arith.constant 0 : i32
    return %c0_i32, %c0_i32_0 : i32, i32
  }
  func.func @transform_15(%arg0: i32) -> (i32, i32, i32) {
    %c0_i32 = arith.constant 0 : i32
    %c0_i32_0 = arith.constant 0 : i32
    %c0_i32_1 = arith.constant 0 : i32
    return %arg0, %c0_i32, %c0_i32_0 : i32, i32, i32
  }
  func.func @transform_16(%arg0: i32) -> (i32, i32, i32) {
    %c0_i32 = arith.constant 0 : i32
    %c0_i32_0 = arith.constant 0 : i32
    %c0_i32_1 = arith.constant 0 : i32
    return %arg0, %c0_i32, %c0_i32_0 : i32, i32, i32
  }
  func.func @transform_17(%arg0: i32) -> (i32, i32, i32) {
    %c0_i32 = arith.constant 0 : i32
    %c0_i32_0 = arith.constant 0 : i32
    %c0_i32_1 = arith.constant 0 : i32
    return %arg0, %c0_i32, %c0_i32_0 : i32, i32, i32
  }
}

</mosaic_0001>

<llo_original>
// kernel: tpu_custom_call.1
$region0: #{tpu_custom_call.1}
  #allocation0 [shape = 'u32[]', space=smem, size = 0x4, offset = 0x4, fixed_abs, tag = 'smem constant byte address 0x4 - core index']
  #allocation1 [shape = 'u32[144,128]{1,0:T(1,128)}', space=vmem, size = 0x12000, scoped, tag = 'internal scratch']
  %s0 = inlined_call_operand.hbm [shape: f32[2,8,32], index: 0, kind: input, shape index: {}]
  %s1 = inlined_call_operand.hbm [shape: f32[2,8,32], index: 1, kind: input, shape index: {}]
  %s2 = inlined_call_operand.hbm [shape: f32[2,8,32], index: 2, kind: input, shape index: {}, may-alias: {2,17}]
  %s3 = inlined_call_operand.hbm [shape: f32[1,32], index: 3, kind: input, shape index: {}]
  %s4 = inlined_call_operand.hbm [shape: f32[1,32], index: 4, kind: input, shape index: {}]
  %s5 = inlined_call_operand.hbm [shape: f32[1,32], index: 5, kind: input, shape index: {}]
  %s6 = inlined_call_operand.hbm [shape: f32[1,32], index: 6, kind: input, shape index: {}]
  %s7 = inlined_call_operand.hbm [shape: bf16[32,96], index: 7, kind: input, shape index: {}]
  %s8 = inlined_call_operand.hbm [shape: f32[1,96], index: 8, kind: input, shape index: {}]
  %s9 = inlined_call_operand.hbm [shape: bf16[32,32], index: 9, kind: input, shape index: {}]
  %s10 = inlined_call_operand.hbm [shape: f32[1,32], index: 10, kind: input, shape index: {}]
  %s11 = inlined_call_operand.hbm [shape: bf16[32,128], index: 11, kind: input, shape index: {}]
  %s12 = inlined_call_operand.hbm [shape: f32[1,128], index: 12, kind: input, shape index: {}]
  %s13 = inlined_call_operand.hbm [shape: bf16[128,32], index: 13, kind: input, shape index: {}]
  %s14 = inlined_call_operand.hbm [shape: f32[1,32], index: 14, kind: input, shape index: {}]
  %s15 = inlined_call_operand.hbm [shape: f32[2,8,32], index: 15, kind: output, shape index: {0}]
  %s16 = inlined_call_operand.hbm [shape: f32[2,8,32], index: 16, kind: output, shape index: {1}]
  %s17 = inlined_call_operand.hbm [shape: f32[2,8,32], index: 17, kind: output, shape index: {2}, may-alias: {2,17}]
  %18 = xla_tuple %s15, %s16, %s17
  %s19 = sld [smem:[#allocation0]]
  $region146: #{tpu_custom_call.1} parent=0
    _
  %s21 = ssub.s32 1, %s19
  %s22 = scalar_select 0, %s21, %s19
  $region1: #{tpu_custom_call.1} parent=0
    #allocation2 [shape = 'u8[8192]{0}', space=vmem, size = 0x2000, scoped, tag = 'input window, operand 0, single buffered']
    #allocation3 [shape = 's32[1]{0}', space=sflag, size = 0x4, scoped, tag = 'scoped memory for tpu_custom_call.1']
    #allocation4 [shape = 's32[1]{0}', space=sflag, size = 0x4, scoped, tag = 'scoped memory for tpu_custom_call.1']
    #allocation5 [shape = 'u8[8192]{0}', space=vmem, size = 0x2000, scoped, tag = 'input window, operand 1, single buffered']
    #allocation6 [shape = 's32[1]{0}', space=sflag, size = 0x4, scoped, tag = 'scoped memory for tpu_custom_call.1']
    #allocation7 [shape = 'u8[8192]{0}', space=vmem, size = 0x2000, scoped, tag = 'input window, operand 2, single buffered']
    #allocation8 [shape = 'u8[512]{0}', space=vmem, size = 0x400, scoped, tag = 'input window, operand 3, single buffered']
    #allocation9 [shape = 's32[1]{0}', space=sflag, size = 0x4, scoped, tag = 'scoped memory for tpu_custom_call.1']
    #allocation10 [shape = 'u8[512]{0}', space=vmem, size = 0x400, scoped, tag = 'input window, operand 4, single buffered']
    #allocation11 [shape = 'u8[512]{0}', space=vmem, size = 0x400, scoped, tag = 'input window, operand 5, single buffered']
    #allocation12 [shape = 's32[1]{0}', space=sflag, size = 0x4, scoped, tag = 'scoped memory for tpu_custom_call.1']
    #allocation13 [shape = 'u8[512]{0}', space=vmem, size = 0x400, scoped, tag = 'input window, operand 6, single buffered']
    #allocation14 [shape = 'u8[8192]{0}', space=vmem, size = 0x2000, scoped, tag = 'input window, operand 7, single buffered']
    #allocation15 [shape = 's32[1]{0}', space=sflag, size = 0x4, scoped, tag = 'scoped memory for tpu_custom_call.1']
    #allocation16 [shape = 'u8[512]{0}', space=vmem, size = 0x400, scoped, tag = 'input window, operand 8, single buffered']
    #allocation17 [shape = 'u8[8192]{0}', space=vmem, size = 0x2000, scoped, tag = 'input window, operand 9, single buffered']
    #allocation18 [shape = 's32[1]{0}', space=sflag, size = 0x4, scoped, tag = 'scoped memory for tpu_custom_call.1']
    #allocation19 [shape = 'u8[512]{0}', space=vmem, size = 0x400, scoped, tag = 'input window, operand 10, single buffered']
    #allocation20 [shape = 'u8[8192]{0}', space=vmem, size = 0x2000, scoped, tag = 'input window, operand 11, single buffered']
    #allocation21 [shape = 's32[1]{0}', space=sflag, size = 0x4, scoped, tag = 'scoped memory for tpu_custom_call.1']
    #allocation22 [shape = 'u8[512]{0}', space=vmem, size = 0x400, scoped, tag = 'input window, operand 12, single buffered']
    #allocation23 [shape = 'u8[32768]{0}', space=vmem, size = 0x8000, scoped, tag = 'input window, operand 13, single buffered']
    #allocation24 [shape = 's32[1]{0}', space=sflag, size = 0x4, scoped, tag = 'scoped memory for tpu_custom_call.1']
    #allocation25 [shape = 'u8[512]{0}', space=vmem, size = 0x400, scoped, tag = 'input window, operand 14, single buffered']
    #allocation26 [shape = 'u8[8192]{0}', space=vmem, size = 0x2000, scoped, tag = 'output window, operand 0, single buffered']
    #allocation27 [shape = 'u8[8192]{0}', space=vmem, size = 0x2000, scoped, tag = 'output window, operand 1, single buffered']
    #allocation28 [shape = 's32[1]{0}', space=sflag, size = 0x4, scoped, tag = 'scoped memory for tpu_custom_call.1']
    #allocation29 [shape = 'u8[8192]{0}', space=vmem, size = 0x2000, scoped, tag = 'output window, operand 2, single buffered']
    %23 = vsyncpa [#allocation3], 0
    %24 = vsyncpa [#allocation6], 0
    %25 = vsyncpa [#allocation9], 0
    %26 = vsyncpa [#allocation12], 0
    %27 = vsyncpa [#allocation15], 0
    %28 = vsyncpa [#allocation18], 0
    %29 = vsyncpa [#allocation21], 0
    %30 = vsyncpa [#allocation24], 0
    %31 = vsyncpa [#allocation4], 0
    %32 = vsyncpa [#allocation28], 0
    // Predicated region
    $region2: #{tpu_custom_call.1} parent=1 // pred_check
      _
    $region3: #{tpu_custom_call.1} parent=1 // pred_check_branch
      %34 = sbr.rel (0) target = $region5
    $region4: #{tpu_custom_call.1} parent=1 // pred_region
      %s36 = ssub.s32 256, 256
      %37 = vsyncadd [#allocation3], %s36
      %s38 = sshll.u32 [#allocation2], 4
      %s39 = int_to_ptr.vmem [resolvable:$true] %s38
      %44 = dma.hbm_to_vmem [thread:$0]  %s0, 256, %s39, [#allocation3], 128, 128, 8
    $region5: #{tpu_custom_call.1} parent=1 // pred_fallthru
      _
    // Predicated region
    $region6: #{tpu_custom_call.1} parent=1 // pred_check
      _
    $region7: #{tpu_custom_call.1} parent=1 // pred_check_branch
      %46 = sbr.rel (0) target = $region9
    $region8: #{tpu_custom_call.1} parent=1 // pred_region
      %s48 = ssub.s32 256, 256
      %49 = vsyncadd [#allocation6], %s48
      %s50 = sshll.u32 [#allocation5], 4
      %s51 = int_to_ptr.vmem [resolvable:$true] %s50
      %56 = dma.hbm_to_vmem [thread:$0]  %s1, 256, %s51, [#allocation6], 128, 128, 8
    $region9: #{tpu_custom_call.1} parent=1 // pred_fallthru
      _
    // Predicated region
    $region10: #{tpu_custom_call.1} parent=1 // pred_check
      _
    $region11: #{tpu_custom_call.1} parent=1 // pred_check_branch
      %58 = sbr.rel (0) target = $region13
    $region12: #{tpu_custom_call.1} parent=1 // pred_region
      %s60 = ssub.s32 256, 256
      %61 = vsyncadd [#allocation6], %s60
      %s62 = sshll.u32 [#allocation7], 4
      %s63 = int_to_ptr.vmem [resolvable:$true] %s62
      %68 = dma.hbm_to_vmem [thread:$0]  %s2, 256, %s63, [#allocation6], 128, 128, 8
    $region13: #{tpu_custom_call.1} parent=1 // pred_fallthru
      _
    // Predicated region
    $region14: #{tpu_custom_call.1} parent=1 // pred_check
      _
    $region15: #{tpu_custom_call.1} parent=1 // pred_check_branch
      %70 = sbr.rel (0) target = $region17
    $region16: #{tpu_custom_call.1} parent=1 // pred_region
      %s72 = ssub.s32 16, 16
      %73 = vsyncadd [#allocation9], %s72
      %s75 = sshll.u32 [#allocation8], 4
      %s76 = int_to_ptr.vmem [resolvable:$true] %s75
      %78 = dma.hbm_to_vmem [thread:$0]  %s3, 16, %s76, [#allocation9]
    $region17: #{tpu_custom_call.1} parent=1 // pred_fallthru
      _
    // Predicated region
    $region18: #{tpu_custom_call.1} parent=1 // pred_check
      _
    $region19: #{tpu_custom_call.1} parent=1 // pred_check_branch
      %80 = sbr.rel (0) target = $region21
    $region20: #{tpu_custom_call.1} parent=1 // pred_region
      %s82 = ssub.s32 16, 16
      %83 = vsyncadd [#allocation9], %s82
      %s85 = sshll.u32 [#allocation10], 4
      %s86 = int_to_ptr.vmem [resolvable:$true] %s85
      %88 = dma.hbm_to_vmem [thread:$0]  %s4, 16, %s86, [#allocation9]
    $region21: #{tpu_custom_call.1} parent=1 // pred_fallthru
      _
    // Predicated region
    $region22: #{tpu_custom_call.1} parent=1 // pred_check
      _
    $region23: #{tpu_custom_call.1} parent=1 // pred_check_branch
      %90 = sbr.rel (0) target = $region25
    $region24: #{tpu_custom_call.1} parent=1 // pred_region
      %s92 = ssub.s32 16, 16
      %93 = vsyncadd [#allocation12], %s92
      %s95 = sshll.u32 [#allocation11], 4
      %s96 = int_to_ptr.vmem [resolvable:$true] %s95
      %98 = dma.hbm_to_vmem [thread:$0]  %s5, 16, %s96, [#allocation12]
    $region25: #{tpu_custom_call.1} parent=1 // pred_fallthru
      _
    // Predicated region
    $region26: #{tpu_custom_call.1} parent=1 // pred_check
      _
    $region27: #{tpu_custom_call.1} parent=1 // pred_check_branch
      %100 = sbr.rel (0) target = $region29
    $region28: #{tpu_custom_call.1} parent=1 // pred_region
      %s102 = ssub.s32 16, 16
      %103 = vsyncadd [#allocation12], %s102
      %s105 = sshll.u32 [#allocation13], 4
      %s106 = int_to_ptr.vmem [resolvable:$true] %s105
      %108 = dma.hbm_to_vmem [thread:$0]  %s6, 16, %s106, [#allocation12]
    $region29: #{tpu_custom_call.1} parent=1 // pred_fallthru
      _
    // Predicated region
    $region30: #{tpu_custom_call.1} parent=1 // pred_check
      _
    $region31: #{tpu_custom_call.1} parent=1 // pred_check_branch
      %110 = sbr.rel (0) target = $region33
    $region32: #{tpu_custom_call.1} parent=1 // pred_region
      %s112 = ssub.s32 256, 256
      %113 = vsyncadd [#allocation15], %s112
      %s114 = sshll.u32 [#allocation14], 4
      %s115 = int_to_ptr.vmem [resolvable:$true] %s114
      %120 = dma.hbm_to_vmem [thread:$0]  %s7, 256, %s115, [#allocation15], 64, 64, 4
    $region33: #{tpu_custom_call.1} parent=1 // pred_fallthru
      _
    // Predicated region
    $region34: #{tpu_custom_call.1} parent=1 // pred_check
      _
    $region35: #{tpu_custom_call.1} parent=1 // pred_check_branch
      %122 = sbr.rel (0) target = $region37
    $region36: #{tpu_custom_call.1} parent=1 // pred_region
      %s124 = ssub.s32 16, 16
      %125 = vsyncadd [#allocation15], %s124
      %s127 = sshll.u32 [#allocation16], 4
      %s128 = int_to_ptr.vmem [resolvable:$true] %s127
      %130 = dma.hbm_to_vmem [thread:$0]  %s8, 16, %s128, [#allocation15]
    $region37: #{tpu_custom_call.1} parent=1 // pred_fallthru
      _
    // Predicated region
    $region38: #{tpu_custom_call.1} parent=1 // pred_check
      _
    $region39: #{tpu_custom_call.1} parent=1 // pred_check_branch
      %132 = sbr.rel (0) target = $region41
    $region40: #{tpu_custom_call.1} parent=1 // pred_region
      %s134 = ssub.s32 256, 256
      %135 = vsyncadd [#allocation18], %s134
      %s136 = sshll.u32 [#allocation17], 4
      %s137 = int_to_ptr.vmem [resolvable:$true] %s136
      %142 = dma.hbm_to_vmem [thread:$0]  %s9, 256, %s137, [#allocation18], 64, 64, 4
    $region41: #{tpu_custom_call.1} parent=1 // pred_fallthru
      _
    // Predicated region
    $region42: #{tpu_custom_call.1} parent=1 // pred_check
      _
    $region43: #{tpu_custom_call.1} parent=1 // pred_check_branch
      %144 = sbr.rel (0) target = $region45
    $region44: #{tpu_custom_call.1} parent=1 // pred_region
      %s146 = ssub.s32 16, 16
      %147 = vsyncadd [#allocation18], %s146
      %s149 = sshll.u32 [#allocation19], 4
      %s150 = int_to_ptr.vmem [resolvable:$true] %s149
      %152 = dma.hbm_to_vmem [thread:$0]  %s10, 16, %s150, [#allocation18]
    $region45: #{tpu_custom_call.1} parent=1 // pred_fallthru
      _
    // Predicated region
    $region46: #{tpu_custom_call.1} parent=1 // pred_check
      _
    $region47: #{tpu_custom_call.1} parent=1 // pred_check_branch
      %154 = sbr.rel (0) target = $region49
    $region48: #{tpu_custom_call.1} parent=1 // pred_region
      %s156 = ssub.s32 256, 256
      %157 = vsyncadd [#allocation21], %s156
      %s158 = sshll.u32 [#allocation20], 4
      %s159 = int_to_ptr.vmem [resolvable:$true] %s158
      %164 = dma.hbm_to_vmem [thread:$0]  %s11, 256, %s159, [#allocation21], 64, 64, 4
    $region49: #{tpu_custom_call.1} parent=1 // pred_fallthru
      _
    // Predicated region
    $region50: #{tpu_custom_call.1} parent=1 // pred_check
      _
    $region51: #{tpu_custom_call.1} parent=1 // pred_check_branch
      %166 = sbr.rel (0) target = $region53
    $region52: #{tpu_custom_call.1} parent=1 // pred_region
      %s168 = ssub.s32 16, 16
      %169 = vsyncadd [#allocation21], %s168
      %s171 = sshll.u32 [#allocation22], 4
      %s172 = int_to_ptr.vmem [resolvable:$true] %s171
      %174 = dma.hbm_to_vmem [thread:$0]  %s12, 16, %s172, [#allocation21]
    $region53: #{tpu_custom_call.1} parent=1 // pred_fallthru
      _
    // Predicated region
    $region54: #{tpu_custom_call.1} parent=1 // pred_check
      _
    $region55: #{tpu_custom_call.1} parent=1 // pred_check_branch
      %176 = sbr.rel (0) target = $region57
    $region56: #{tpu_custom_call.1} parent=1 // pred_region
      %s178 = ssub.s32 1024, 1024
      %179 = vsyncadd [#allocation24], %s178
      %s180 = sshll.u32 [#allocation23], 4
      %s181 = int_to_ptr.vmem [resolvable:$true] %s180
      %186 = dma.hbm_to_vmem [thread:$0]  %s13, 1024, %s181, [#allocation24], 64, 64, 4
    $region57: #{tpu_custom_call.1} parent=1 // pred_fallthru
      _
    // Predicated region
    $region58: #{tpu_custom_call.1} parent=1 // pred_check
      _
    $region59: #{tpu_custom_call.1} parent=1 // pred_check_branch
      %188 = sbr.rel (0) target = $region61
    $region60: #{tpu_custom_call.1} parent=1 // pred_region
      %s190 = ssub.s32 16, 16
      %191 = vsyncadd [#allocation24], %s190
      %s193 = sshll.u32 [#allocation25], 4
      %s194 = int_to_ptr.vmem [resolvable:$true] %s193
      %196 = dma.hbm_to_vmem [thread:$0]  %s14, 16, %s194, [#allocation24]
    $region61: #{tpu_custom_call.1} parent=1 // pred_fallthru
      _
    // Predicated region
    $region62: #{tpu_custom_call.1} parent=1 // pred_check
      _
    $region63: #{tpu_custom_call.1} parent=1 // pred_check_branch
      %198 = sbr.rel (0) target = $region65
    $region64: #{tpu_custom_call.1} parent=1 // pred_region
      %199 = dma.done [#allocation3], 256
    $region65: #{tpu_custom_call.1} parent=1 // pred_fallthru
      _
    // Predicated region
    $region66: #{tpu_custom_call.1} parent=1 // pred_check
      _
    $region67: #{tpu_custom_call.1} parent=1 // pred_check_branch
      %201 = sbr.rel (0) target = $region69
    $region68: #{tpu_custom_call.1} parent=1 // pred_region
      %202 = dma.done [#allocation6], 256
    $region69: #{tpu_custom_call.1} parent=1 // pred_fallthru
      _
    // Predicated region
    $region70: #{tpu_custom_call.1} parent=1 // pred_check
      _
    $region71: #{tpu_custom_call.1} parent=1 // pred_check_branch
      %204 = sbr.rel (0) target = $region73
    $region72: #{tpu_custom_call.1} parent=1 // pred_region
      %205 = dma.done [#allocation6], 256
    $region73: #{tpu_custom_call.1} parent=1 // pred_fallthru
      _
    // Predicated region
    $region74: #{tpu_custom_call.1} parent=1 // pred_check
      _
    $region75: #{tpu_custom_call.1} parent=1 // pred_check_branch
      %207 = sbr.rel (0) target = $region77
    $region76: #{tpu_custom_call.1} parent=1 // pred_region
      %208 = dma.done [#allocation9], 16
    $region77: #{tpu_custom_call.1} parent=1 // pred_fallthru
      _
    // Predicated region
    $region78: #{tpu_custom_call.1} parent=1 // pred_check
      _
    $region79: #{tpu_custom_call.1} parent=1 // pred_check_branch
      %210 = sbr.rel (0) target = $region81
    $region80: #{tpu_custom_call.1} parent=1 // pred_region
      %211 = dma.done [#allocation9], 16
    $region81: #{tpu_custom_call.1} parent=1 // pred_fallthru
      _
    // Predicated region
    $region82: #{tpu_custom_call.1} parent=1 // pred_check
      _
    $region83: #{tpu_custom_call.1} parent=1 // pred_check_branch
      %213 = sbr.rel (0) target = $region85
    $region84: #{tpu_custom_call.1} parent=1 // pred_region
      %214 = dma.done [#allocation12], 16
    $region85: #{tpu_custom_call.1} parent=1 // pred_fallthru
      _
    // Predicated region
    $region86: #{tpu_custom_call.1} parent=1 // pred_check
      _
    $region87: #{tpu_custom_call.1} parent=1 // pred_check_branch
      %216 = sbr.rel (0) target = $region89
    $region88: #{tpu_custom_call.1} parent=1 // pred_region
      %217 = dma.done [#allocation12], 16
    $region89: #{tpu_custom_call.1} parent=1 // pred_fallthru
      _
    // Predicated region
    $region90: #{tpu_custom_call.1} parent=1 // pred_check
      _
    $region91: #{tpu_custom_call.1} parent=1 // pred_check_branch
      %219 = sbr.rel (0) target = $region93
    $region92: #{tpu_custom_call.1} parent=1 // pred_region
      %220 = dma.done [#allocation15], 256
    $region93: #{tpu_custom_call.1} parent=1 // pred_fallthru
      _
    // Predicated region
    $region94: #{tpu_custom_call.1} parent=1 // pred_check
      _
    $region95: #{tpu_custom_call.1} parent=1 // pred_check_branch
      %222 = sbr.rel (0) target = $region97
    $region96: #{tpu_custom_call.1} parent=1 // pred_region
      %223 = dma.done [#allocation15], 16
    $region97: #{tpu_custom_call.1} parent=1 // pred_fallthru
      _
    // Predicated region
    $region98: #{tpu_custom_call.1} parent=1 // pred_check
      _
    $region99: #{tpu_custom_call.1} parent=1 // pred_check_branch
      %225 = sbr.rel (0) target = $region101
    $region100: #{tpu_custom_call.1} parent=1 // pred_region
      %226 = dma.done [#allocation18], 256
    $region101: #{tpu_custom_call.1} parent=1 // pred_fallthru
      _
    // Predicated region
    $region102: #{tpu_custom_call.1} parent=1 // pred_check
      _
    $region103: #{tpu_custom_call.1} parent=1 // pred_check_branch
      %228 = sbr.rel (0) target = $region105
    $region104: #{tpu_custom_call.1} parent=1 // pred_region
      %229 = dma.done [#allocation18], 16
    $region105: #{tpu_custom_call.1} parent=1 // pred_fallthru
      _
    // Predicated region
    $region106: #{tpu_custom_call.1} parent=1 // pred_check
      _
    $region107: #{tpu_custom_call.1} parent=1 // pred_check_branch
      %231 = sbr.rel (0) target = $region109
    $region108: #{tpu_custom_call.1} parent=1 // pred_region
      %232 = dma.done [#allocation21], 256
    $region109: #{tpu_custom_call.1} parent=1 // pred_fallthru
      _
    // Predicated region
    $region110: #{tpu_custom_call.1} parent=1 // pred_check
      _
    $region111: #{tpu_custom_call.1} parent=1 // pred_check_branch
      %234 = sbr.rel (0) target = $region113
    $region112: #{tpu_custom_call.1} parent=1 // pred_region
      %235 = dma.done [#allocation21], 16
    $region113: #{tpu_custom_call.1} parent=1 // pred_fallthru
      _
    // Predicated region
    $region114: #{tpu_custom_call.1} parent=1 // pred_check
      _
    $region115: #{tpu_custom_call.1} parent=1 // pred_check_branch
      %237 = sbr.rel (0) target = $region117
    $region116: #{tpu_custom_call.1} parent=1 // pred_region
      %238 = dma.done [#allocation24], 1024
    $region117: #{tpu_custom_call.1} parent=1 // pred_fallthru
      _
    // Predicated region
    $region118: #{tpu_custom_call.1} parent=1 // pred_check
      _
    $region119: #{tpu_custom_call.1} parent=1 // pred_check_branch
      %240 = sbr.rel (0) target = $region121
    $region120: #{tpu_custom_call.1} parent=1 // pred_region
      %241 = dma.done [#allocation24], 16
    $region121: #{tpu_custom_call.1} parent=1 // pred_fallthru
      _
    %v243 = vld [vmem:[#allocation7] sm:$0xff]
    %v244 = vld [vmem:[#allocation7 + $0x8] sm:$0xff]
    %v245 = vld [vmem:[#allocation2] sm:$0xff]
    %v246 = vld [vmem:[#allocation2 + $0x8] sm:$0xff]
    %v247 = vadd.f32 %v243, %v245
    %v248 = vadd.f32 %v244, %v246
    %v249 = vld [vmem:[#allocation5] sm:$0xff]
    %v250 = vld [vmem:[#allocation5 + $0x8] sm:$0xff]
    %v251 = vadd.f32 %v247, %v249
    %v252 = vadd.f32 %v248, %v250
    %vm253 = vcmask 261120
    %254 = vst.msk [vmem:[#allocation29] sm:$0xff] %vm253, %v251
    %255 = vst.msk [vmem:[#allocation29 + $0x8] sm:$0xff] %vm253, %v252
    %v256 = vsel %vm253, %v251, 0.0
    %257 = vadd.xlane.f32.xlu0 %v256
    %v258 = vpop.xlane.xlu0 %257
    %v259 = vsel %vm253, %v252, 0.0
    %260 = vadd.xlane.f32.xlu0 %v259
    %v261 = vpop.xlane.xlu0 %260
    %v262 = vrcp.pop 32.0
    %v263 = vmul.f32 %v258, %v262
    %v264 = vmul.f32 %v261, %v262
    %v265 = vsub.f32 %v251, %v263
    %v266 = vsub.f32 %v252, %v264
    %v267 = vmul.f32 %v265, %v265
    %v268 = vmul.f32 %v266, %v266
    %v269 = vsel %vm253, %v267, 0.0
    %270 = vadd.xlane.f32.xlu0 %v269
    %v271 = vpop.xlane.xlu0 %270
    %v272 = vsel %vm253, %v268, 0.0
    %273 = vadd.xlane.f32.xlu0 %v272
    %v274 = vpop.xlane.xlu0 %273
    %v275 = vmul.f32 %v271, %v262
    %v276 = vmul.f32 %v274, %v262
    %v277 = vadd.f32 %v275, 1e-05
    %v278 = vadd.f32 %v276, 1e-05
    %v279 = vrsqrt.pop %v277
    %v280 = vrsqrt.pop %v278
    %v281 = vmul.f32 %v265, %v279
    %v282 = vmul.f32 %v266, %v280
    %v283 = vld [vmem:[#allocation8] sm:$0x1]
    %v285 = vlaneseq
    %v286 = vshrl.u32 %v285, 7
    %v287 = vsub.s32 0, %v286
    %v288 = vrot.slane %v283, %v287
    %v290 = vmul.f32 %v281, %v288
    %v291 = vmul.f32 %v282, %v288
    %v292 = vld [vmem:[#allocation10] sm:$0x1]
    %v294 = vlaneseq
    %v295 = vshrl.u32 %v294, 7
    %v296 = vsub.s32 0, %v295
    %v297 = vrot.slane %v292, %v296
    %v299 = vadd.f32 %v290, %v297
    %v300 = vadd.f32 %v291, %v297
    %v301 = vpack.c.bf16 %v300, %v299
    %v302 = vld [vmem:[#allocation11] sm:$0x1]
    %v304 = vlaneseq
    %v305 = vshrl.u32 %v304, 7
    %v306 = vsub.s32 0, %v305
    %v307 = vrot.slane %v302, %v306
    %v309 = vmul.f32 %v281, %v307
    %v310 = vmul.f32 %v282, %v307
    %v311 = vld [vmem:[#allocation13] sm:$0x1]
    %v313 = vlaneseq
    %v314 = vshrl.u32 %v313, 7
    %v315 = vsub.s32 0, %v314
    %v316 = vrot.slane %v311, %v315
    %v318 = vadd.f32 %v309, %v316
    %v319 = vadd.f32 %v310, %v316
    %v320 = vpack.c.bf16 %v319, %v318
    %v321 = vld [vmem:[#allocation14] sm:$0xf]
    %v322 = vld [vmem:[#allocation14 + $0x4] sm:$0xf]
    %v323 = vld [vmem:[#allocation14 + $0x8] sm:$0xf]
    %v324 = vld [vmem:[#allocation14 + $0xc] sm:$0xf]
    %v325 = vld [vmem:[#allocation16] sm:$0x1]
    %v327 = vlaneseq
    %v328 = vshrl.u32 %v327, 7
    %v329 = vsub.s32 0, %v328
    %v330 = vrot.slane %v325, %v329
    %v336 = vunpack.c.l.b16 %v321
    %v337 = vunpack.c.l.b16 %v322
    %v338 = vunpack.c.l.b16 %v323
    %v339 = vunpack.c.l.b16 %v324
    %v340 = vpack.c.b16 %v337, %v336
    %v341 = vpack.c.b16 %v339, %v338
    %v345 = vsel %vm253, %v301, 0
    %347 = vmatprep.subr.bf16.mxu0 0
    %348 = vmatpush1.bf16.msra.mxu0 %v340
    %349 = vmatprep.subr.bf16.mxu0 0
    %350 = vmatpush1.bf16.msra.mxu0 %v341
    %351 = vmatprep.subr.bf16.mxu0 0
    %352 = vmatpush1.bf16.msra.mxu0 0
    %353 = vmatprep.subr.bf16.mxu0 0
    %354 = vmatpush1.bf16.msra.mxu0 0
    %355 = vmatprep.subr.bf16.mxu0 0
    %356 = vmatpush1.bf16.msra.mxu0 0
    %357 = vmatprep.subr.bf16.mxu0 0
    %358 = vmatpush1.bf16.msra.mxu0 0
    %359 = vmatprep.subr.bf16.mxu0 0
    %360 = vmatpush1.bf16.msra.mxu0 0
    %361 = vmatprep.subr.bf16.mxu0 0
    %362 = vmatpush1.bf16.msra.mxu0 0
    %363 = vmatprep.subr.bf16.mxu0 0
    %364 = vmatpush1.bf16.msra.mxu0 0
    %365 = vmatprep.subr.bf16.mxu0 0
    %366 = vmatpush1.bf16.msra.mxu0 0
    %367 = vmatprep.subr.bf16.mxu0 0
    %368 = vmatpush1.bf16.msra.mxu0 0
    %369 = vmatprep.subr.bf16.mxu0 0
    %370 = vmatpush1.bf16.msra.mxu0 0
    %371 = vmatprep.subr.bf16.mxu0 0
    %372 = vmatpush1.bf16.msra.mxu0 0
    %373 = vmatprep.subr.bf16.mxu0 0
    %374 = vmatpush1.bf16.msra.mxu0 0
    %375 = vmatprep.subr.bf16.mxu0 0
    %376 = vmatpush1.bf16.msra.mxu0 0
    %377 = vmatprep.subr.bf16.mxu0 0
    %378 = vmatpush1.bf16.msra.mxu0 0
    %379 = vmatprep.mubr.bf16.mxu0 0
    %380 = vmatmul.mubr.bf16.gmra.mrb[0].mxu0 %v345
    %v381 = vpop.f32.mrb[0].mxu0
    %v382 = vadd.f32 %v330, %v381
    %v383 = vpop.f32.mrb[0].mxu0
    %v384 = vpop.f32.mrb[0].mxu0
    %v385 = vadd.f32 %v330, %v384
    %v386 = vpop.f32.mrb[0].mxu0
    %387 = vdwg.mxu0
    %v388 = vmul.f32 %v382, 0.35355338
    %v389 = vmul.f32 %v385, 0.35355338
    %v390 = vpack.c.bf16 %v389, %v388
    %v391 = vpack.c.bf16 %v385, %v382
    %393 = vrot.lane.b32.xlu0 %v391, 96
    %v394 = vpop.permute.xlu0 %393
    %vm395 = vcmask 64512
    %v397 = vsel %vm395, %v390, 0
    %v400 = vsel %vm395, %v394, 0
    %402 = vmatprep.subr.bf16.mxu0 0
    %403 = vmatpush1.bf16.xpose.msra.mxu0 %v400
    %404 = vmatprep.subr.bf16.mxu0 0
    %405 = vmatpush1.bf16.xpose.msra.mxu0 0
    %406 = vmatprep.subr.bf16.mxu0 0
    %407 = vmatpush1.bf16.xpose.msra.mxu0 0
    %408 = vmatprep.subr.bf16.mxu0 0
    %409 = vmatpush1.bf16.xpose.msra.mxu0 0
    %410 = vmatprep.subr.bf16.mxu0 0
    %411 = vmatpush1.bf16.xpose.msra.mxu0 0
    %412 = vmatprep.subr.bf16.mxu0 0
    %413 = vmatpush1.bf16.xpose.msra.mxu0 0
    %414 = vmatprep.subr.bf16.mxu0 0
    %415 = vmatpush1.bf16.xpose.msra.mxu0 0
    %416 = vmatprep.subr.bf16.mxu0 0
    %417 = vmatpush1.bf16.xpose.msra.mxu0 0
    %418 = vmatprep.subr.bf16.mxu0 0
    %419 = vmatpush1.bf16.xpose.msra.mxu0 0
    %420 = vmatprep.subr.bf16.mxu0 0
    %421 = vmatpush1.bf16.xpose.msra.mxu0 0
    %422 = vmatprep.subr.bf16.mxu0 0
    %423 = vmatpush1.bf16.xpose.msra.mxu0 0
    %424 = vmatprep.subr.bf16.mxu0 0
    %425 = vmatpush1.bf16.xpose.msra.mxu0 0
    %426 = vmatprep.subr.bf16.mxu0 0
    %427 = vmatpush1.bf16.xpose.msra.mxu0 0
    %428 = vmatprep.subr.bf16.mxu0 0
    %429 = vmatpush1.bf16.xpose.msra.mxu0 0
    %430 = vmatprep.subr.bf16.mxu0 0
    %431 = vmatpush1.bf16.xpose.msra.mxu0 0
    %432 = vmatprep.subr.bf16.mxu0 0
    %433 = vmatpush1.bf16.xpose.msra.mxu0 0
    %434 = vmatprep.mubr.bf16.mxu0 0
    %435 = vmatmul.mubr.bf16.gmra.mrb[0].mxu0 %v397
    %v436 = vpop.f32.mrb[0].mxu0
    %v437 = vadd.f32 0.0, %v436
    %v438 = vpop.f32.mrb[0].mxu0
    %v439 = vpop.f32.mrb[0].mxu0
    %v440 = vpop.f32.mrb[0].mxu0
    %441 = vdwg.mxu0
    %v442 = vsel %vm395, %v437, -inf
    %443 = vmax.xlane.f32.xlu0 %v442
    %v444 = vpop.xlane.xlu0 %443
    %v445 = vsub.f32 %v437, %v444
    %v446 = vmul.f32 %v445, 1.442695
    %v447 = vpow.pop %v446
    %v448 = vsel %vm395, %v447, 0.0
    %449 = vadd.xlane.f32.xlu0 %v448
    %v450 = vpop.xlane.xlu0 %449
    %v451 = vrcp.pop %v450
    %v452 = vmul.f32 %v447, %v451
    %v453 = vpack.c.bf16 %v452, %v452
    %454 = vrot.lane.b32.xlu0 %v391, 64
    %v455 = vpop.permute.xlu0 %454
    %v457 = vsel %vm395, %v453, 0
    %vm459 = vcmask 1043456
    %v461 = vsel %vm459, %v455, 0
    %463 = vmatprep.subr.bf16.mxu0 0
    %464 = vmatpush1.bf16.msra.mxu0 %v461
    %465 = vmatprep.subr.bf16.mxu0 0
    %466 = vmatpush1.bf16.msra.mxu0 0
    %467 = vmatprep.subr.bf16.mxu0 0
    %468 = vmatpush1.bf16.msra.mxu0 0
    %469 = vmatprep.subr.bf16.mxu0 0
    %470 = vmatpush1.bf16.msra.mxu0 0
    %471 = vmatprep.subr.bf16.mxu0 0
    %472 = vmatpush1.bf16.msra.mxu0 0
    %473 = vmatprep.subr.bf16.mxu0 0
    %474 = vmatpush1.bf16.msra.mxu0 0
    %475 = vmatprep.subr.bf16.mxu0 0
    %476 = vmatpush1.bf16.msra.mxu0 0
    %477 = vmatprep.subr.bf16.mxu0 0
    %478 = vmatpush1.bf16.msra.mxu0 0
    %479 = vmatprep.subr.bf16.mxu0 0
    %480 = vmatpush1.bf16.msra.mxu0 0
    %481 = vmatprep.subr.bf16.mxu0 0
    %482 = vmatpush1.bf16.msra.mxu0 0
    %483 = vmatprep.subr.bf16.mxu0 0
    %484 = vmatpush1.bf16.msra.mxu0 0
    %485 = vmatprep.subr.bf16.mxu0 0
    %486 = vmatpush1.bf16.msra.mxu0 0
    %487 = vmatprep.subr.bf16.mxu0 0
    %488 = vmatpush1.bf16.msra.mxu0 0
    %489 = vmatprep.subr.bf16.mxu0 0
    %490 = vmatpush1.bf16.msra.mxu0 0
    %491 = vmatprep.subr.bf16.mxu0 0
    %492 = vmatpush1.bf16.msra.mxu0 0
    %493 = vmatprep.subr.bf16.mxu0 0
    %494 = vmatpush1.bf16.msra.mxu0 0
    %495 = vmatprep.mubr.bf16.mxu0 0
    %496 = vmatmul.mubr.bf16.gmra.mrb[0].mxu0 %v457
    %v497 = vpop.f32.mrb[0].mxu0
    %v498 = vadd.f32 0.0, %v497
    %v499 = vpop.f32.mrb[0].mxu0
    %v500 = vpop.f32.mrb[0].mxu0
    %v501 = vpop.f32.mrb[0].mxu0
    %502 = vdwg.mxu0
    %504 = vrot.lane.b32.xlu0 %v390, 120
    %v505 = vpop.permute.xlu0 %504
    %506 = vrot.lane.b32.xlu0 %v391, 88
    %v507 = vpop.permute.xlu0 %506
    %v509 = vsel %vm395, %v505, 0
    %v512 = vsel %vm395, %v507, 0
    %514 = vmatprep.subr.bf16.mxu0 0
    %515 = vmatpush1.bf16.xpose.msra.mxu0 %v512
    %516 = vmatprep.subr.bf16.mxu0 0
    %517 = vmatpush1.bf16.xpose.msra.mxu0 0
    %518 = vmatprep.subr.bf16.mxu0 0
    %519 = vmatpush1.bf16.xpose.msra.mxu0 0
    %520 = vmatprep.subr.bf16.mxu0 0
    %521 = vmatpush1.bf16.xpose.msra.mxu0 0
    %522 = vmatprep.subr.bf16.mxu0 0
    %523 = vmatpush1.bf16.xpose.msra.mxu0 0
    %524 = vmatprep.subr.bf16.mxu0 0
    %525 = vmatpush1.bf16.xpose.msra.mxu0 0
    %526 = vmatprep.subr.bf16.mxu0 0
    %527 = vmatpush1.bf16.xpose.msra.mxu0 0
    %528 = vmatprep.subr.bf16.mxu0 0
    %529 = vmatpush1.bf16.xpose.msra.mxu0 0
    %530 = vmatprep.subr.bf16.mxu0 0
    %531 = vmatpush1.bf16.xpose.msra.mxu0 0
    %532 = vmatprep.subr.bf16.mxu0 0
    %533 = vmatpush1.bf16.xpose.msra.mxu0 0
    %534 = vmatprep.subr.bf16.mxu0 0
    %535 = vmatpush1.bf16.xpose.msra.mxu0 0
    %536 = vmatprep.subr.bf16.mxu0 0
    %537 = vmatpush1.bf16.xpose.msra.mxu0 0
    %538 = vmatprep.subr.bf16.mxu0 0
    %539 = vmatpush1.bf16.xpose.msra.mxu0 0
    %540 = vmatprep.subr.bf16.mxu0 0
    %541 = vmatpush1.bf16.xpose.msra.mxu0 0
    %542 = vmatprep.subr.bf16.mxu0 0
    %543 = vmatpush1.bf16.xpose.msra.mxu0 0
    %544 = vmatprep.subr.bf16.mxu0 0
    %545 = vmatpush1.bf16.xpose.msra.mxu0 0
    %546 = vmatprep.mubr.bf16.mxu0 0
    %547 = vmatmul.mubr.bf16.gmra.mrb[0].mxu0 %v509
    %v548 = vpop.f32.mrb[0].mxu0
    %v549 = vadd.f32 0.0, %v548
    %v550 = vpop.f32.mrb[0].mxu0
    %v551 = vpop.f32.mrb[0].mxu0
    %v552 = vpop.f32.mrb[0].mxu0
    %553 = vdwg.mxu0
    %v554 = vsel %vm395, %v549, -inf
    %555 = vmax.xlane.f32.xlu0 %v554
    %v556 = vpop.xlane.xlu0 %555
    %v557 = vsub.f32 %v549, %v556
    %v558 = vmul.f32 %v557, 1.442695
    %v559 = vpow.pop %v558
    %v560 = vsel %vm395, %v559, 0.0
    %561 = vadd.xlane.f32.xlu0 %v560
    %v562 = vpop.xlane.xlu0 %561
    %v563 = vrcp.pop %v562
    %v564 = vmul.f32 %v559, %v563
    %v565 = vpack.c.bf16 %v564, %v564
    %566 = vrot.lane.b32.xlu0 %v391, 56
    %v567 = vpop.permute.xlu0 %566
    %v569 = vsel %vm395, %v565, 0
    %v572 = vsel %vm459, %v567, 0
    %574 = vmatprep.subr.bf16.mxu0 0
    %575 = vmatpush1.bf16.msra.mxu0 %v572
    %576 = vmatprep.subr.bf16.mxu0 0
    %577 = vmatpush1.bf16.msra.mxu0 0
    %578 = vmatprep.subr.bf16.mxu0 0
    %579 = vmatpush1.bf16.msra.mxu0 0
    %580 = vmatprep.subr.bf16.mxu0 0
    %581 = vmatpush1.bf16.msra.mxu0 0
    %582 = vmatprep.subr.bf16.mxu0 0
    %583 = vmatpush1.bf16.msra.mxu0 0
    %584 = vmatprep.subr.bf16.mxu0 0
    %585 = vmatpush1.bf16.msra.mxu0 0
    %586 = vmatprep.subr.bf16.mxu0 0
    %587 = vmatpush1.bf16.msra.mxu0 0
    %588 = vmatprep.subr.bf16.mxu0 0
    %589 = vmatpush1.bf16.msra.mxu0 0
    %590 = vmatprep.subr.bf16.mxu0 0
    %591 = vmatpush1.bf16.msra.mxu0 0
    %592 = vmatprep.subr.bf16.mxu0 0
    %593 = vmatpush1.bf16.msra.mxu0 0
    %594 = vmatprep.subr.bf16.mxu0 0
    %595 = vmatpush1.bf16.msra.mxu0 0
    %596 = vmatprep.subr.bf16.mxu0 0
    %597 = vmatpush1.bf16.msra.mxu0 0
    %598 = vmatprep.subr.bf16.mxu0 0
    %599 = vmatpush1.bf16.msra.mxu0 0
    %600 = vmatprep.subr.bf16.mxu0 0
    %601 = vmatpush1.bf16.msra.mxu0 0
    %602 = vmatprep.subr.bf16.mxu0 0
    %603 = vmatpush1.bf16.msra.mxu0 0
    %604 = vmatprep.subr.bf16.mxu0 0
    %605 = vmatpush1.bf16.msra.mxu0 0
    %606 = vmatprep.mubr.bf16.mxu0 0
    %607 = vmatmul.mubr.bf16.gmra.mrb[0].mxu0 %v569
    %v608 = vpop.f32.mrb[0].mxu0
    %v609 = vadd.f32 0.0, %v608
    %v610 = vpop.f32.mrb[0].mxu0
    %v611 = vpop.f32.mrb[0].mxu0
    %v612 = vpop.f32.mrb[0].mxu0
    %613 = vdwg.mxu0
    %614 = vrot.lane.b32.xlu0 %v390, 112
    %v615 = vpop.permute.xlu0 %614
    %616 = vrot.lane.b32.xlu0 %v391, 80
    %v617 = vpop.permute.xlu0 %616
    %v619 = vsel %vm395, %v615, 0
    %v622 = vsel %vm395, %v617, 0
    %624 = vmatprep.subr.bf16.mxu0 0
    %625 = vmatpush1.bf16.xpose.msra.mxu0 %v622
    %626 = vmatprep.subr.bf16.mxu0 0
    %627 = vmatpush1.bf16.xpose.msra.mxu0 0
    %628 = vmatprep.subr.bf16.mxu0 0
    %629 = vmatpush1.bf16.xpose.msra.mxu0 0
    %630 = vmatprep.subr.bf16.mxu0 0
    %631 = vmatpush1.bf16.xpose.msra.mxu0 0
    %632 = vmatprep.subr.bf16.mxu0 0
    %633 = vmatpush1.bf16.xpose.msra.mxu0 0
    %634 = vmatprep.subr.bf16.mxu0 0
    %635 = vmatpush1.bf16.xpose.msra.mxu0 0
    %636 = vmatprep.subr.bf16.mxu0 0
    %637 = vmatpush1.bf16.xpose.msra.mxu0 0
    %638 = vmatprep.subr.bf16.mxu0 0
    %639 = vmatpush1.bf16.xpose.msra.mxu0 0
    %640 = vmatprep.subr.bf16.mxu0 0
    %641 = vmatpush1.bf16.xpose.msra.mxu0 0
    %642 = vmatprep.subr.bf16.mxu0 0
    %643 = vmatpush1.bf16.xpose.msra.mxu0 0
    %644 = vmatprep.subr.bf16.mxu0 0
    %645 = vmatpush1.bf16.xpose.msra.mxu0 0
    %646 = vmatprep.subr.bf16.mxu0 0
    %647 = vmatpush1.bf16.xpose.msra.mxu0 0
    %648 = vmatprep.subr.bf16.mxu0 0
    %649 = vmatpush1.bf16.xpose.msra.mxu0 0
    %650 = vmatprep.subr.bf16.mxu0 0
    %651 = vmatpush1.bf16.xpose.msra.mxu0 0
    %652 = vmatprep.subr.bf16.mxu0 0
    %653 = vmatpush1.bf16.xpose.msra.mxu0 0
    %654 = vmatprep.subr.bf16.mxu0 0
    %655 = vmatpush1.bf16.xpose.msra.mxu0 0
    %656 = vmatprep.mubr.bf16.mxu0 0
    %657 = vmatmul.mubr.bf16.gmra.mrb[0].mxu0 %v619
    %v658 = vpop.f32.mrb[0].mxu0
    %v659 = vadd.f32 0.0, %v658
    %v660 = vpop.f32.mrb[0].mxu0
    %v661 = vpop.f32.mrb[0].mxu0
    %v662 = vpop.f32.mrb[0].mxu0
    %663 = vdwg.mxu0
    %v664 = vsel %vm395, %v659, -inf
    %665 = vmax.xlane.f32.xlu0 %v664
    %v666 = vpop.xlane.xlu0 %665
    %v667 = vsub.f32 %v659, %v666
    %v668 = vmul.f32 %v667, 1.442695
    %v669 = vpow.pop %v668
    %v670 = vsel %vm395, %v669, 0.0
    %671 = vadd.xlane.f32.xlu0 %v670
    %v672 = vpop.xlane.xlu0 %671
    %v673 = vrcp.pop %v672
    %v674 = vmul.f32 %v669, %v673
    %v675 = vpack.c.bf16 %v674, %v674
    %676 = vrot.lane.b32.xlu0 %v391, 48
    %v677 = vpop.permute.xlu0 %676
    %v679 = vsel %vm395, %v675, 0
    %v682 = vsel %vm459, %v677, 0
    %684 = vmatprep.subr.bf16.mxu0 0
    %685 = vmatpush1.bf16.msra.mxu0 %v682
    %686 = vmatprep.subr.bf16.mxu0 0
    %687 = vmatpush1.bf16.msra.mxu0 0
    %688 = vmatprep.subr.bf16.mxu0 0
    %689 = vmatpush1.bf16.msra.mxu0 0
    %690 = vmatprep.subr.bf16.mxu0 0
    %691 = vmatpush1.bf16.msra.mxu0 0
    %692 = vmatprep.subr.bf16.mxu0 0
    %693 = vmatpush1.bf16.msra.mxu0 0
    %694 = vmatprep.subr.bf16.mxu0 0
    %695 = vmatpush1.bf16.msra.mxu0 0
    %696 = vmatprep.subr.bf16.mxu0 0
    %697 = vmatpush1.bf16.msra.mxu0 0
    %698 = vmatprep.subr.bf16.mxu0 0
    %699 = vmatpush1.bf16.msra.mxu0 0
    %700 = vmatprep.subr.bf16.mxu0 0
    %701 = vmatpush1.bf16.msra.mxu0 0
    %702 = vmatprep.subr.bf16.mxu0 0
    %703 = vmatpush1.bf16.msra.mxu0 0
    %704 = vmatprep.subr.bf16.mxu0 0
    %705 = vmatpush1.bf16.msra.mxu0 0
    %706 = vmatprep.subr.bf16.mxu0 0
    %707 = vmatpush1.bf16.msra.mxu0 0
    %708 = vmatprep.subr.bf16.mxu0 0
    %709 = vmatpush1.bf16.msra.mxu0 0
    %710 = vmatprep.subr.bf16.mxu0 0
    %711 = vmatpush1.bf16.msra.mxu0 0
    %712 = vmatprep.subr.bf16.mxu0 0
    %713 = vmatpush1.bf16.msra.mxu0 0
    %714 = vmatprep.subr.bf16.mxu0 0
    %715 = vmatpush1.bf16.msra.mxu0 0
    %716 = vmatprep.mubr.bf16.mxu0 0
    %717 = vmatmul.mubr.bf16.gmra.mrb[0].mxu0 %v679
    %v718 = vpop.f32.mrb[0].mxu0
    %v719 = vadd.f32 0.0, %v718
    %v720 = vpop.f32.mrb[0].mxu0
    %v721 = vpop.f32.mrb[0].mxu0
    %v722 = vpop.f32.mrb[0].mxu0
    %723 = vdwg.mxu0
    %724 = vrot.lane.b32.xlu0 %v390, 104
    %v725 = vpop.permute.xlu0 %724
    %726 = vrot.lane.b32.xlu0 %v391, 72
    %v727 = vpop.permute.xlu0 %726
    %v729 = vsel %vm395, %v725, 0
    %v732 = vsel %vm395, %v727, 0
    %734 = vmatprep.subr.bf16.mxu0 0
    %735 = vmatpush1.bf16.xpose.msra.mxu0 %v732
    %736 = vmatprep.subr.bf16.mxu0 0
    %737 = vmatpush1.bf16.xpose.msra.mxu0 0
    %738 = vmatprep.subr.bf16.mxu0 0
    %739 = vmatpush1.bf16.xpose.msra.mxu0 0
    %740 = vmatprep.subr.bf16.mxu0 0
    %741 = vmatpush1.bf16.xpose.msra.mxu0 0
    %742 = vmatprep.subr.bf16.mxu0 0
    %743 = vmatpush1.bf16.xpose.msra.mxu0 0
    %744 = vmatprep.subr.bf16.mxu0 0
    %745 = vmatpush1.bf16.xpose.msra.mxu0 0
    %746 = vmatprep.subr.bf16.mxu0 0
    %747 = vmatpush1.bf16.xpose.msra.mxu0 0
    %748 = vmatprep.subr.bf16.mxu0 0
    %749 = vmatpush1.bf16.xpose.msra.mxu0 0
    %750 = vmatprep.subr.bf16.mxu0 0
    %751 = vmatpush1.bf16.xpose.msra.mxu0 0
    %752 = vmatprep.subr.bf16.mxu0 0
    %753 = vmatpush1.bf16.xpose.msra.mxu0 0
    %754 = vmatprep.subr.bf16.mxu0 0
    %755 = vmatpush1.bf16.xpose.msra.mxu0 0
    %756 = vmatprep.subr.bf16.mxu0 0
    %757 = vmatpush1.bf16.xpose.msra.mxu0 0
    %758 = vmatprep.subr.bf16.mxu0 0
    %759 = vmatpush1.bf16.xpose.msra.mxu0 0
    %760 = vmatprep.subr.bf16.mxu0 0
    %761 = vmatpush1.bf16.xpose.msra.mxu0 0
    %762 = vmatprep.subr.bf16.mxu0 0
    %763 = vmatpush1.bf16.xpose.msra.mxu0 0
    %764 = vmatprep.subr.bf16.mxu0 0
    %765 = vmatpush1.bf16.xpose.msra.mxu0 0
    %766 = vmatprep.mubr.bf16.mxu0 0
    %767 = vmatmul.mubr.bf16.gmra.mrb[0].mxu0 %v729
    %v768 = vpop.f32.mrb[0].mxu0
    %v769 = vadd.f32 0.0, %v768
    %v770 = vpop.f32.mrb[0].mxu0
    %v771 = vpop.f32.mrb[0].mxu0
    %v772 = vpop.f32.mrb[0].mxu0
    %773 = vdwg.mxu0
    %v774 = vsel %vm395, %v769, -inf
    %775 = vmax.xlane.f32.xlu0 %v774
    %v776 = vpop.xlane.xlu0 %775
    %v777 = vsub.f32 %v769, %v776
    %v778 = vmul.f32 %v777, 1.442695
    %v779 = vpow.pop %v778
    %v780 = vsel %vm395, %v779, 0.0
    %781 = vadd.xlane.f32.xlu0 %v780
    %v782 = vpop.xlane.xlu0 %781
    %v783 = vrcp.pop %v782
    %v784 = vmul.f32 %v779, %v783
    %v785 = vpack.c.bf16 %v784, %v784
    %786 = vrot.lane.b32.xlu0 %v391, 40
    %v787 = vpop.permute.xlu0 %786
    %v789 = vsel %vm395, %v785, 0
    %v792 = vsel %vm459, %v787, 0
    %794 = vmatprep.subr.bf16.mxu0 0
    %795 = vmatpush1.bf16.msra.mxu0 %v792
    %796 = vmatprep.subr.bf16.mxu0 0
    %797 = vmatpush1.bf16.msra.mxu0 0
    %798 = vmatprep.subr.bf16.mxu0 0
    %799 = vmatpush1.bf16.msra.mxu0 0
    %800 = vmatprep.subr.bf16.mxu0 0
    %801 = vmatpush1.bf16.msra.mxu0 0
    %802 = vmatprep.subr.bf16.mxu0 0
    %803 = vmatpush1.bf16.msra.mxu0 0
    %804 = vmatprep.subr.bf16.mxu0 0
    %805 = vmatpush1.bf16.msra.mxu0 0
    %806 = vmatprep.subr.bf16.mxu0 0
    %807 = vmatpush1.bf16.msra.mxu0 0
    %808 = vmatprep.subr.bf16.mxu0 0
    %809 = vmatpush1.bf16.msra.mxu0 0
    %810 = vmatprep.subr.bf16.mxu0 0
    %811 = vmatpush1.bf16.msra.mxu0 0
    %812 = vmatprep.subr.bf16.mxu0 0
    %813 = vmatpush1.bf16.msra.mxu0 0
    %814 = vmatprep.subr.bf16.mxu0 0
    %815 = vmatpush1.bf16.msra.mxu0 0
    %816 = vmatprep.subr.bf16.mxu0 0
    %817 = vmatpush1.bf16.msra.mxu0 0
    %818 = vmatprep.subr.bf16.mxu0 0
    %819 = vmatpush1.bf16.msra.mxu0 0
    %820 = vmatprep.subr.bf16.mxu0 0
    %821 = vmatpush1.bf16.msra.mxu0 0
    %822 = vmatprep.subr.bf16.mxu0 0
    %823 = vmatpush1.bf16.msra.mxu0 0
    %824 = vmatprep.subr.bf16.mxu0 0
    %825 = vmatpush1.bf16.msra.mxu0 0
    %826 = vmatprep.mubr.bf16.mxu0 0
    %827 = vmatmul.mubr.bf16.gmra.mrb[0].mxu0 %v789
    %v828 = vpop.f32.mrb[0].mxu0
    %v829 = vadd.f32 0.0, %v828
    %v830 = vpop.f32.mrb[0].mxu0
    %v831 = vpop.f32.mrb[0].mxu0
    %v832 = vpop.f32.mrb[0].mxu0
    %833 = vdwg.mxu0
    %835 = vrot.lane.b32.xlu0 %v609, 8
    %v836 = vpop.permute.xlu0 %835
    %839 = vrot.lane.b32.xlu0 %v719, 16
    %v840 = vpop.permute.xlu0 %839
    %843 = vrot.lane.b32.xlu0 %v829, 24
    %v844 = vpop.permute.xlu0 %843
    %v846 = vsel %vm395, %v498, %v836
    %vm847 = vcmask 130048
    %v848 = vsel %vm847, %v846, %v840
    %vm849 = vcmask 195584
    %v850 = vsel %vm849, %v848, %v844
    %v851 = vrot.slane %v390, 4
    %v852 = vrot.slane %v391, 4
    %853 = vrot.lane.b32.xlu0 %v852, 96
    %v854 = vpop.permute.xlu0 %853
    %v856 = vsel %vm395, %v851, 0
    %v859 = vsel %vm395, %v854, 0
    %861 = vmatprep.subr.bf16.mxu0 0
    %862 = vmatpush1.bf16.xpose.msra.mxu0 %v859
    %863 = vmatprep.subr.bf16.mxu0 0
    %864 = vmatpush1.bf16.xpose.msra.mxu0 0
    %865 = vmatprep.subr.bf16.mxu0 0
    %866 = vmatpush1.bf16.xpose.msra.mxu0 0
    %867 = vmatprep.subr.bf16.mxu0 0
    %868 = vmatpush1.bf16.xpose.msra.mxu0 0
    %869 = vmatprep.subr.bf16.mxu0 0
    %870 = vmatpush1.bf16.xpose.msra.mxu0 0
    %871 = vmatprep.subr.bf16.mxu0 0
    %872 = vmatpush1.bf16.xpose.msra.mxu0 0
    %873 = vmatprep.subr.bf16.mxu0 0
    %874 = vmatpush1.bf16.xpose.msra.mxu0 0
    %875 = vmatprep.subr.bf16.mxu0 0
    %876 = vmatpush1.bf16.xpose.msra.mxu0 0
    %877 = vmatprep.subr.bf16.mxu0 0
    %878 = vmatpush1.bf16.xpose.msra.mxu0 0
    %879 = vmatprep.subr.bf16.mxu0 0
    %880 = vmatpush1.bf16.xpose.msra.mxu0 0
    %881 = vmatprep.subr.bf16.mxu0 0
    %882 = vmatpush1.bf16.xpose.msra.mxu0 0
    %883 = vmatprep.subr.bf16.mxu0 0
    %884 = vmatpush1.bf16.xpose.msra.mxu0 0
    %885 = vmatprep.subr.bf16.mxu0 0
    %886 = vmatpush1.bf16.xpose.msra.mxu0 0
    %887 = vmatprep.subr.bf16.mxu0 0
    %888 = vmatpush1.bf16.xpose.msra.mxu0 0
    %889 = vmatprep.subr.bf16.mxu0 0
    %890 = vmatpush1.bf16.xpose.msra.mxu0 0
    %891 = vmatprep.subr.bf16.mxu0 0
    %892 = vmatpush1.bf16.xpose.msra.mxu0 0
    %893 = vmatprep.mubr.bf16.mxu0 0
    %894 = vmatmul.mubr.bf16.gmra.mrb[0].mxu0 %v856
    %v895 = vpop.f32.mrb[0].mxu0
    %v896 = vadd.f32 0.0, %v895
    %v897 = vpop.f32.mrb[0].mxu0
    %v898 = vpop.f32.mrb[0].mxu0
    %v899 = vpop.f32.mrb[0].mxu0
    %900 = vdwg.mxu0
    %v901 = vsel %vm395, %v896, -inf
    %902 = vmax.xlane.f32.xlu0 %v901
    %v903 = vpop.xlane.xlu0 %902
    %v904 = vsub.f32 %v896, %v903
    %v905 = vmul.f32 %v904, 1.442695
    %v906 = vpow.pop %v905
    %v907 = vsel %vm395, %v906, 0.0
    %908 = vadd.xlane.f32.xlu0 %v907
    %v909 = vpop.xlane.xlu0 %908
    %v910 = vrcp.pop %v909
    %v911 = vmul.f32 %v906, %v910
    %v912 = vpack.c.bf16 %v911, %v911
    %913 = vrot.lane.b32.xlu0 %v852, 64
    %v914 = vpop.permute.xlu0 %913
    %v916 = vsel %vm395, %v912, 0
    %v919 = vsel %vm459, %v914, 0
    %921 = vmatprep.subr.bf16.mxu0 0
    %922 = vmatpush1.bf16.msra.mxu0 %v919
    %923 = vmatprep.subr.bf16.mxu0 0
    %924 = vmatpush1.bf16.msra.mxu0 0
    %925 = vmatprep.subr.bf16.mxu0 0
    %926 = vmatpush1.bf16.msra.mxu0 0
    %927 = vmatprep.subr.bf16.mxu0 0
    %928 = vmatpush1.bf16.msra.mxu0 0
    %929 = vmatprep.subr.bf16.mxu0 0
    %930 = vmatpush1.bf16.msra.mxu0 0
    %931 = vmatprep.subr.bf16.mxu0 0
    %932 = vmatpush1.bf16.msra.mxu0 0
    %933 = vmatprep.subr.bf16.mxu0 0
    %934 = vmatpush1.bf16.msra.mxu0 0
    %935 = vmatprep.subr.bf16.mxu0 0
    %936 = vmatpush1.bf16.msra.mxu0 0
    %937 = vmatprep.subr.bf16.mxu0 0
    %938 = vmatpush1.bf16.msra.mxu0 0
    %939 = vmatprep.subr.bf16.mxu0 0
    %940 = vmatpush1.bf16.msra.mxu0 0
    %941 = vmatprep.subr.bf16.mxu0 0
    %942 = vmatpush1.bf16.msra.mxu0 0
    %943 = vmatprep.subr.bf16.mxu0 0
    %944 = vmatpush1.bf16.msra.mxu0 0
    %945 = vmatprep.subr.bf16.mxu0 0
    %946 = vmatpush1.bf16.msra.mxu0 0
    %947 = vmatprep.subr.bf16.mxu0 0
    %948 = vmatpush1.bf16.msra.mxu0 0
    %949 = vmatprep.subr.bf16.mxu0 0
    %950 = vmatpush1.bf16.msra.mxu0 0
    %951 = vmatprep.subr.bf16.mxu0 0
    %952 = vmatpush1.bf16.msra.mxu0 0
    %953 = vmatprep.mubr.bf16.mxu0 0
    %954 = vmatmul.mubr.bf16.gmra.mrb[0].mxu0 %v916
    %v955 = vpop.f32.mrb[0].mxu0
    %v956 = vadd.f32 0.0, %v955
    %v957 = vpop.f32.mrb[0].mxu0
    %v958 = vpop.f32.mrb[0].mxu0
    %v959 = vpop.f32.mrb[0].mxu0
    %960 = vdwg.mxu0
    %961 = vrot.lane.b32.xlu0 %v851, 120
    %v962 = vpop.permute.xlu0 %961
    %963 = vrot.lane.b32.xlu0 %v852, 88
    %v964 = vpop.permute.xlu0 %963
    %v966 = vsel %vm395, %v962, 0
    %v969 = vsel %vm395, %v964, 0
    %971 = vmatprep.subr.bf16.mxu0 0
    %972 = vmatpush1.bf16.xpose.msra.mxu0 %v969
    %973 = vmatprep.subr.bf16.mxu0 0
    %974 = vmatpush1.bf16.xpose.msra.mxu0 0
    %975 = vmatprep.subr.bf16.mxu0 0
    %976 = vmatpush1.bf16.xpose.msra.mxu0 0
    %977 = vmatprep.subr.bf16.mxu0 0
    %978 = vmatpush1.bf16.xpose.msra.mxu0 0
    %979 = vmatprep.subr.bf16.mxu0 0
    %980 = vmatpush1.bf16.xpose.msra.mxu0 0
    %981 = vmatprep.subr.bf16.mxu0 0
    %982 = vmatpush1.bf16.xpose.msra.mxu0 0
    %983 = vmatprep.subr.bf16.mxu0 0
    %984 = vmatpush1.bf16.xpose.msra.mxu0 0
    %985 = vmatprep.subr.bf16.mxu0 0
    %986 = vmatpush1.bf16.xpose.msra.mxu0 0
    %987 = vmatprep.subr.bf16.mxu0 0
    %988 = vmatpush1.bf16.xpose.msra.mxu0 0
    %989 = vmatprep.subr.bf16.mxu0 0
    %990 = vmatpush1.bf16.xpose.msra.mxu0 0
    %991 = vmatprep.subr.bf16.mxu0 0
    %992 = vmatpush1.bf16.xpose.msra.mxu0 0
    %993 = vmatprep.subr.bf16.mxu0 0
    %994 = vmatpush1.bf16.xpose.msra.mxu0 0
    %995 = vmatprep.subr.bf16.mxu0 0
    %996 = vmatpush1.bf16.xpose.msra.mxu0 0
    %997 = vmatprep.subr.bf16.mxu0 0
    %998 = vmatpush1.bf16.xpose.msra.mxu0 0
    %999 = vmatprep.subr.bf16.mxu0 0
    %1000 = vmatpush1.bf16.xpose.msra.mxu0 0
    %1001 = vmatprep.subr.bf16.mxu0 0
    %1002 = vmatpush1.bf16.xpose.msra.mxu0 0
    %1003 = vmatprep.mubr.bf16.mxu0 0
    %1004 = vmatmul.mubr.bf16.gmra.mrb[0].mxu0 %v966
    %v1005 = vpop.f32.mrb[0].mxu0
    %v1006 = vadd.f32 0.0, %v1005
    %v1007 = vpop.f32.mrb[0].mxu0
    %v1008 = vpop.f32.mrb[0].mxu0
    %v1009 = vpop.f32.mrb[0].mxu0
    %1010 = vdwg.mxu0
    %v1011 = vsel %vm395, %v1006, -inf
    %1012 = vmax.xlane.f32.xlu0 %v1011
    %v1013 = vpop.xlane.xlu0 %1012
    %v1014 = vsub.f32 %v1006, %v1013
    %v1015 = vmul.f32 %v1014, 1.442695
    %v1016 = vpow.pop %v1015
    %v1017 = vsel %vm395, %v1016, 0.0
    %1018 = vadd.xlane.f32.xlu0 %v1017
    %v1019 = vpop.xlane.xlu0 %1018
    %v1020 = vrcp.pop %v1019
    %v1021 = vmul.f32 %v1016, %v1020
    %v1022 = vpack.c.bf16 %v1021, %v1021
    %1023 = vrot.lane.b32.xlu0 %v852, 56
    %v1024 = vpop.permute.xlu0 %1023
    %v1026 = vsel %vm395, %v1022, 0
    %v1029 = vsel %vm459, %v1024, 0
    %1031 = vmatprep.subr.bf16.mxu0 0
    %1032 = vmatpush1.bf16.msra.mxu0 %v1029
    %1033 = vmatprep.subr.bf16.mxu0 0
    %1034 = vmatpush1.bf16.msra.mxu0 0
    %1035 = vmatprep.subr.bf16.mxu0 0
    %1036 = vmatpush1.bf16.msra.mxu0 0
    %1037 = vmatprep.subr.bf16.mxu0 0
    %1038 = vmatpush1.bf16.msra.mxu0 0
    %1039 = vmatprep.subr.bf16.mxu0 0
    %1040 = vmatpush1.bf16.msra.mxu0 0
    %1041 = vmatprep.subr.bf16.mxu0 0
    %1042 = vmatpush1.bf16.msra.mxu0 0
    %1043 = vmatprep.subr.bf16.mxu0 0
    %1044 = vmatpush1.bf16.msra.mxu0 0
    %1045 = vmatprep.subr.bf16.mxu0 0
    %1046 = vmatpush1.bf16.msra.mxu0 0
    %1047 = vmatprep.subr.bf16.mxu0 0
    %1048 = vmatpush1.bf16.msra.mxu0 0
    %1049 = vmatprep.subr.bf16.mxu0 0
    %1050 = vmatpush1.bf16.msra.mxu0 0
    %1051 = vmatprep.subr.bf16.mxu0 0
    %1052 = vmatpush1.bf16.msra.mxu0 0
    %1053 = vmatprep.subr.bf16.mxu0 0
    %1054 = vmatpush1.bf16.msra.mxu0 0
    %1055 = vmatprep.subr.bf16.mxu0 0
    %1056 = vmatpush1.bf16.msra.mxu0 0
    %1057 = vmatprep.subr.bf16.mxu0 0
    %1058 = vmatpush1.bf16.msra.mxu0 0
    %1059 = vmatprep.subr.bf16.mxu0 0
    %1060 = vmatpush1.bf16.msra.mxu0 0
    %1061 = vmatprep.subr.bf16.mxu0 0
    %1062 = vmatpush1.bf16.msra.mxu0 0
    %1063 = vmatprep.mubr.bf16.mxu0 0
    %1064 = vmatmul.mubr.bf16.gmra.mrb[0].mxu0 %v1026
    %v1065 = vpop.f32.mrb[0].mxu0
    %v1066 = vadd.f32 0.0, %v1065
    %v1067 = vpop.f32.mrb[0].mxu0
    %v1068 = vpop.f32.mrb[0].mxu0
    %v1069 = vpop.f32.mrb[0].mxu0
    %1070 = vdwg.mxu0
    %1071 = vrot.lane.b32.xlu0 %v851, 112
    %v1072 = vpop.permute.xlu0 %1071
    %1073 = vrot.lane.b32.xlu0 %v852, 80
    %v1074 = vpop.permute.xlu0 %1073
    %v1076 = vsel %vm395, %v1072, 0
    %v1079 = vsel %vm395, %v1074, 0
    %1081 = vmatprep.subr.bf16.mxu0 0
    %1082 = vmatpush1.bf16.xpose.msra.mxu0 %v1079
    %1083 = vmatprep.subr.bf16.mxu0 0
    %1084 = vmatpush1.bf16.xpose.msra.mxu0 0
    %1085 = vmatprep.subr.bf16.mxu0 0
    %1086 = vmatpush1.bf16.xpose.msra.mxu0 0
    %1087 = vmatprep.subr.bf16.mxu0 0
    %1088 = vmatpush1.bf16.xpose.msra.mxu0 0
    %1089 = vmatprep.subr.bf16.mxu0 0
    %1090 = vmatpush1.bf16.xpose.msra.mxu0 0
    %1091 = vmatprep.subr.bf16.mxu0 0
    %1092 = vmatpush1.bf16.xpose.msra.mxu0 0
    %1093 = vmatprep.subr.bf16.mxu0 0
    %1094 = vmatpush1.bf16.xpose.msra.mxu0 0
    %1095 = vmatprep.subr.bf16.mxu0 0
    %1096 = vmatpush1.bf16.xpose.msra.mxu0 0
    %1097 = vmatprep.subr.bf16.mxu0 0
    %1098 = vmatpush1.bf16.xpose.msra.mxu0 0
    %1099 = vmatprep.subr.bf16.mxu0 0
    %1100 = vmatpush1.bf16.xpose.msra.mxu0 0
    %1101 = vmatprep.subr.bf16.mxu0 0
    %1102 = vmatpush1.bf16.xpose.msra.mxu0 0
    %1103 = vmatprep.subr.bf16.mxu0 0
    %1104 = vmatpush1.bf16.xpose.msra.mxu0 0
    %1105 = vmatprep.subr.bf16.mxu0 0
    %1106 = vmatpush1.bf16.xpose.msra.mxu0 0
    %1107 = vmatprep.subr.bf16.mxu0 0
    %1108 = vmatpush1.bf16.xpose.msra.mxu0 0
    %1109 = vmatprep.subr.bf16.mxu0 0
    %1110 = vmatpush1.bf16.xpose.msra.mxu0 0
    %1111 = vmatprep.subr.bf16.mxu0 0
    %1112 = vmatpush1.bf16.xpose.msra.mxu0 0
    %1113 = vmatprep.mubr.bf16.mxu0 0
    %1114 = vmatmul.mubr.bf16.gmra.mrb[0].mxu0 %v1076
    %v1115 = vpop.f32.mrb[0].mxu0
    %v1116 = vadd.f32 0.0, %v1115
    %v1117 = vpop.f32.mrb[0].mxu0
    %v1118 = vpop.f32.mrb[0].mxu0
    %v1119 = vpop.f32.mrb[0].mxu0
    %1120 = vdwg.mxu0
    %v1121 = vsel %vm395, %v1116, -inf
    %1122 = vmax.xlane.f32.xlu0 %v1121
    %v1123 = vpop.xlane.xlu0 %1122
    %v1124 = vsub.f32 %v1116, %v1123
    %v1125 = vmul.f32 %v1124, 1.442695
    %v1126 = vpow.pop %v1125
    %v1127 = vsel %vm395, %v1126, 0.0
    %1128 = vadd.xlane.f32.xlu0 %v1127
    %v1129 = vpop.xlane.xlu0 %1128
    %v1130 = vrcp.pop %v1129
    %v1131 = vmul.f32 %v1126, %v1130
    %v1132 = vpack.c.bf16 %v1131, %v1131
    %1133 = vrot.lane.b32.xlu0 %v852, 48
    %v1134 = vpop.permute.xlu0 %1133
    %v1136 = vsel %vm395, %v1132, 0
    %v1139 = vsel %vm459, %v1134, 0
    %1141 = vmatprep.subr.bf16.mxu0 0
    %1142 = vmatpush1.bf16.msra.mxu0 %v1139
    %1143 = vmatprep.subr.bf16.mxu0 0
    %1144 = vmatpush1.bf16.msra.mxu0 0
    %1145 = vmatprep.subr.bf16.mxu0 0
    %1146 = vmatpush1.bf16.msra.mxu0 0
    %1147 = vmatprep.subr.bf16.mxu0 0
    %1148 = vmatpush1.bf16.msra.mxu0 0
    %1149 = vmatprep.subr.bf16.mxu0 0
    %1150 = vmatpush1.bf16.msra.mxu0 0
    %1151 = vmatprep.subr.bf16.mxu0 0
    %1152 = vmatpush1.bf16.msra.mxu0 0
    %1153 = vmatprep.subr.bf16.mxu0 0
    %1154 = vmatpush1.bf16.msra.mxu0 0
    %1155 = vmatprep.subr.bf16.mxu0 0
    %1156 = vmatpush1.bf16.msra.mxu0 0
    %1157 = vmatprep.subr.bf16.mxu0 0
    %1158 = vmatpush1.bf16.msra.mxu0 0
    %1159 = vmatprep.subr.bf16.mxu0 0
    %1160 = vmatpush1.bf16.msra.mxu0 0
    %1161 = vmatprep.subr.bf16.mxu0 0
    %1162 = vmatpush1.bf16.msra.mxu0 0
    %1163 = vmatprep.subr.bf16.mxu0 0
    %1164 = vmatpush1.bf16.msra.mxu0 0
    %1165 = vmatprep.subr.bf16.mxu0 0
    %1166 = vmatpush1.bf16.msra.mxu0 0
    %1167 = vmatprep.subr.bf16.mxu0 0
    %1168 = vmatpush1.bf16.msra.mxu0 0
    %1169 = vmatprep.subr.bf16.mxu0 0
    %1170 = vmatpush1.bf16.msra.mxu0 0
    %1171 = vmatprep.subr.bf16.mxu0 0
    %1172 = vmatpush1.bf16.msra.mxu0 0
    %1173 = vmatprep.mubr.bf16.mxu0 0
    %1174 = vmatmul.mubr.bf16.gmra.mrb[0].mxu0 %v1136
    %v1175 = vpop.f32.mrb[0].mxu0
    %v1176 = vadd.f32 0.0, %v1175
    %v1177 = vpop.f32.mrb[0].mxu0
    %v1178 = vpop.f32.mrb[0].mxu0
    %v1179 = vpop.f32.mrb[0].mxu0
    %1180 = vdwg.mxu0
    %1181 = vrot.lane.b32.xlu0 %v851, 104
    %v1182 = vpop.permute.xlu0 %1181
    %1183 = vrot.lane.b32.xlu0 %v852, 72
    %v1184 = vpop.permute.xlu0 %1183
    %v1186 = vsel %vm395, %v1182, 0
    %v1189 = vsel %vm395, %v1184, 0
    %1191 = vmatprep.subr.bf16.mxu0 0
    %1192 = vmatpush1.bf16.xpose.msra.mxu0 %v1189
    %1193 = vmatprep.subr.bf16.mxu0 0
    %1194 = vmatpush1.bf16.xpose.msra.mxu0 0
    %1195 = vmatprep.subr.bf16.mxu0 0
    %1196 = vmatpush1.bf16.xpose.msra.mxu0 0
    %1197 = vmatprep.subr.bf16.mxu0 0
    %1198 = vmatpush1.bf16.xpose.msra.mxu0 0
    %1199 = vmatprep.subr.bf16.mxu0 0
    %1200 = vmatpush1.bf16.xpose.msra.mxu0 0
    %1201 = vmatprep.subr.bf16.mxu0 0
    %1202 = vmatpush1.bf16.xpose.msra.mxu0 0
    %1203 = vmatprep.subr.bf16.mxu0 0
    %1204 = vmatpush1.bf16.xpose.msra.mxu0 0
    %1205 = vmatprep.subr.bf16.mxu0 0
    %1206 = vmatpush1.bf16.xpose.msra.mxu0 0
    %1207 = vmatprep.subr.bf16.mxu0 0
    %1208 = vmatpush1.bf16.xpose.msra.mxu0 0
    %1209 = vmatprep.subr.bf16.mxu0 0
    %1210 = vmatpush1.bf16.xpose.msra.mxu0 0
    %1211 = vmatprep.subr.bf16.mxu0 0
    %1212 = vmatpush1.bf16.xpose.msra.mxu0 0
    %1213 = vmatprep.subr.bf16.mxu0 0
    %1214 = vmatpush1.bf16.xpose.msra.mxu0 0
    %1215 = vmatprep.subr.bf16.mxu0 0
    %1216 = vmatpush1.bf16.xpose.msra.mxu0 0
    %1217 = vmatprep.subr.bf16.mxu0 0
    %1218 = vmatpush1.bf16.xpose.msra.mxu0 0
    %1219 = vmatprep.subr.bf16.mxu0 0
    %1220 = vmatpush1.bf16.xpose.msra.mxu0 0
    %1221 = vmatprep.subr.bf16.mxu0 0
    %1222 = vmatpush1.bf16.xpose.msra.mxu0 0
    %1223 = vmatprep.mubr.bf16.mxu0 0
    %1224 = vmatmul.mubr.bf16.gmra.mrb[0].mxu0 %v1186
    %v1225 = vpop.f32.mrb[0].mxu0
    %v1226 = vadd.f32 0.0, %v1225
    %v1227 = vpop.f32.mrb[0].mxu0
    %v1228 = vpop.f32.mrb[0].mxu0
    %v1229 = vpop.f32.mrb[0].mxu0
    %1230 = vdwg.mxu0
    %v1231 = vsel %vm395, %v1226, -inf
    %1232 = vmax.xlane.f32.xlu0 %v1231
    %v1233 = vpop.xlane.xlu0 %1232
    %v1234 = vsub.f32 %v1226, %v1233
    %v1235 = vmul.f32 %v1234, 1.442695
    %v1236 = vpow.pop %v1235
    %v1237 = vsel %vm395, %v1236, 0.0
    %1238 = vadd.xlane.f32.xlu0 %v1237
    %v1239 = vpop.xlane.xlu0 %1238
    %v1240 = vrcp.pop %v1239
    %v1241 = vmul.f32 %v1236, %v1240
    %v1242 = vpack.c.bf16 %v1241, %v1241
    %1243 = vrot.lane.b32.xlu0 %v852, 40
    %v1244 = vpop.permute.xlu0 %1243
    %v1246 = vsel %vm395, %v1242, 0
    %v1249 = vsel %vm459, %v1244, 0
    %1251 = vmatprep.subr.bf16.mxu0 0
    %1252 = vmatpush1.bf16.msra.mxu0 %v1249
    %1253 = vmatprep.subr.bf16.mxu0 0
    %1254 = vmatpush1.bf16.msra.mxu0 0
    %1255 = vmatprep.subr.bf16.mxu0 0
    %1256 = vmatpush1.bf16.msra.mxu0 0
    %1257 = vmatprep.subr.bf16.mxu0 0
    %1258 = vmatpush1.bf16.msra.mxu0 0
    %1259 = vmatprep.subr.bf16.mxu0 0
    %1260 = vmatpush1.bf16.msra.mxu0 0
    %1261 = vmatprep.subr.bf16.mxu0 0
    %1262 = vmatpush1.bf16.msra.mxu0 0
    %1263 = vmatprep.subr.bf16.mxu0 0
    %1264 = vmatpush1.bf16.msra.mxu0 0
    %1265 = vmatprep.subr.bf16.mxu0 0
    %1266 = vmatpush1.bf16.msra.mxu0 0
    %1267 = vmatprep.subr.bf16.mxu0 0
    %1268 = vmatpush1.bf16.msra.mxu0 0
    %1269 = vmatprep.subr.bf16.mxu0 0
    %1270 = vmatpush1.bf16.msra.mxu0 0
    %1271 = vmatprep.subr.bf16.mxu0 0
    %1272 = vmatpush1.bf16.msra.mxu0 0
    %1273 = vmatprep.subr.bf16.mxu0 0
    %1274 = vmatpush1.bf16.msra.mxu0 0
    %1275 = vmatprep.subr.bf16.mxu0 0
    %1276 = vmatpush1.bf16.msra.mxu0 0
    %1277 = vmatprep.subr.bf16.mxu0 0
    %1278 = vmatpush1.bf16.msra.mxu0 0
    %1279 = vmatprep.subr.bf16.mxu0 0
    %1280 = vmatpush1.bf16.msra.mxu0 0
    %1281 = vmatprep.subr.bf16.mxu0 0
    %1282 = vmatpush1.bf16.msra.mxu0 0
    %1283 = vmatprep.mubr.bf16.mxu0 0
    %1284 = vmatmul.mubr.bf16.gmra.mrb[0].mxu0 %v1246
    %v1285 = vpop.f32.mrb[0].mxu0
    %v1286 = vadd.f32 0.0, %v1285
    %v1287 = vpop.f32.mrb[0].mxu0
    %v1288 = vpop.f32.mrb[0].mxu0
    %v1289 = vpop.f32.mrb[0].mxu0
    %1290 = vdwg.mxu0
    %1292 = vrot.lane.b32.xlu0 %v1066, 8
    %v1293 = vpop.permute.xlu0 %1292
    %1296 = vrot.lane.b32.xlu0 %v1176, 16
    %v1297 = vpop.permute.xlu0 %1296
    %1300 = vrot.lane.b32.xlu0 %v1286, 24
    %v1301 = vpop.permute.xlu0 %1300
    %v1303 = vsel %vm395, %v956, %v1293
    %v1304 = vsel %vm847, %v1303, %v1297
    %v1305 = vsel %vm849, %v1304, %v1301
    %v1306 = vpack.c.bf16 %v1305, %v850
    %v1307 = vld [vmem:[#allocation17] sm:$0xf]
    %v1308 = vld [vmem:[#allocation17 + $0x4] sm:$0xf]
    %v1309 = vld [vmem:[#allocation17 + $0x8] sm:$0xf]
    %v1310 = vld [vmem:[#allocation17 + $0xc] sm:$0xf]
    %v1311 = vld [vmem:[#allocation19] sm:$0x1]
    %v1313 = vlaneseq
    %v1314 = vshrl.u32 %v1313, 7
    %v1315 = vsub.s32 0, %v1314
    %v1316 = vrot.slane %v1311, %v1315
    %v1322 = vunpack.c.l.b16 %v1307
    %v1323 = vunpack.c.l.b16 %v1308
    %v1324 = vunpack.c.l.b16 %v1309
    %v1325 = vunpack.c.l.b16 %v1310
    %v1326 = vpack.c.b16 %v1323, %v1322
    %v1327 = vpack.c.b16 %v1325, %v1324
    %v1331 = vsel %vm253, %v1306, 0
    %1333 = vmatprep.subr.bf16.mxu0 0
    %1334 = vmatpush1.bf16.msra.mxu0 %v1326
    %1335 = vmatprep.subr.bf16.mxu0 0
    %1336 = vmatpush1.bf16.msra.mxu0 %v1327
    %1337 = vmatprep.subr.bf16.mxu0 0
    %1338 = vmatpush1.bf16.msra.mxu0 0
    %1339 = vmatprep.subr.bf16.mxu0 0
    %1340 = vmatpush1.bf16.msra.mxu0 0
    %1341 = vmatprep.subr.bf16.mxu0 0
    %1342 = vmatpush1.bf16.msra.mxu0 0
    %1343 = vmatprep.subr.bf16.mxu0 0
    %1344 = vmatpush1.bf16.msra.mxu0 0
    %1345 = vmatprep.subr.bf16.mxu0 0
    %1346 = vmatpush1.bf16.msra.mxu0 0
    %1347 = vmatprep.subr.bf16.mxu0 0
    %1348 = vmatpush1.bf16.msra.mxu0 0
    %1349 = vmatprep.subr.bf16.mxu0 0
    %1350 = vmatpush1.bf16.msra.mxu0 0
    %1351 = vmatprep.subr.bf16.mxu0 0
    %1352 = vmatpush1.bf16.msra.mxu0 0
    %1353 = vmatprep.subr.bf16.mxu0 0
    %1354 = vmatpush1.bf16.msra.mxu0 0
    %1355 = vmatprep.subr.bf16.mxu0 0
    %1356 = vmatpush1.bf16.msra.mxu0 0
    %1357 = vmatprep.subr.bf16.mxu0 0
    %1358 = vmatpush1.bf16.msra.mxu0 0
    %1359 = vmatprep.subr.bf16.mxu0 0
    %1360 = vmatpush1.bf16.msra.mxu0 0
    %1361 = vmatprep.subr.bf16.mxu0 0
    %1362 = vmatpush1.bf16.msra.mxu0 0
    %1363 = vmatprep.subr.bf16.mxu0 0
    %1364 = vmatpush1.bf16.msra.mxu0 0
    %1365 = vmatprep.mubr.bf16.mxu0 0
    %1366 = vmatmul.mubr.bf16.gmra.mrb[0].mxu0 %v1331
    %v1367 = vpop.f32.mrb[0].mxu0
    %v1368 = vadd.f32 %v1316, %v1367
    %v1369 = vpop.f32.mrb[0].mxu0
    %v1370 = vpop.f32.mrb[0].mxu0
    %v1371 = vadd.f32 %v1316, %v1370
    %v1372 = vpop.f32.mrb[0].mxu0
    %1373 = vdwg.mxu0
    %1374 = vst.msk [vmem:[#allocation26] sm:$0xff] %vm253, %v1368
    %1375 = vst.msk [vmem:[#allocation26 + $0x8] sm:$0xff] %vm253, %v1371
    %v1376 = vld [vmem:[#allocation20] sm:$0xf]
    %v1377 = vld [vmem:[#allocation20 + $0x4] sm:$0xf]
    %v1378 = vld [vmem:[#allocation20 + $0x8] sm:$0xf]
    %v1379 = vld [vmem:[#allocation20 + $0xc] sm:$0xf]
    %v1380 = vld [vmem:[#allocation22] sm:$0x1]
    %v1382 = vlaneseq
    %v1383 = vshrl.u32 %v1382, 7
    %v1384 = vsub.s32 0, %v1383
    %v1385 = vrot.slane %v1380, %v1384
    %v1391 = vunpack.c.l.b16 %v1376
    %v1392 = vunpack.c.l.b16 %v1377
    %v1393 = vunpack.c.l.b16 %v1378
    %v1394 = vunpack.c.l.b16 %v1379
    %v1395 = vpack.c.b16 %v1392, %v1391
    %v1396 = vpack.c.b16 %v1394, %v1393
    %v1400 = vsel %vm253, %v320, 0
    %1402 = vmatprep.subr.bf16.mxu0 0
    %1403 = vmatpush1.bf16.msra.mxu0 %v1395
    %1404 = vmatprep.subr.bf16.mxu0 0
    %1405 = vmatpush1.bf16.msra.mxu0 %v1396
    %1406 = vmatprep.subr.bf16.mxu0 0
    %1407 = vmatpush1.bf16.msra.mxu0 0
    %1408 = vmatprep.subr.bf16.mxu0 0
    %1409 = vmatpush1.bf16.msra.mxu0 0
    %1410 = vmatprep.subr.bf16.mxu0 0
    %1411 = vmatpush1.bf16.msra.mxu0 0
    %1412 = vmatprep.subr.bf16.mxu0 0
    %1413 = vmatpush1.bf16.msra.mxu0 0
    %1414 = vmatprep.subr.bf16.mxu0 0
    %1415 = vmatpush1.bf16.msra.mxu0 0
    %1416 = vmatprep.subr.bf16.mxu0 0
    %1417 = vmatpush1.bf16.msra.mxu0 0
    %1418 = vmatprep.subr.bf16.mxu0 0
    %1419 = vmatpush1.bf16.msra.mxu0 0
    %1420 = vmatprep.subr.bf16.mxu0 0
    %1421 = vmatpush1.bf16.msra.mxu0 0
    %1422 = vmatprep.subr.bf16.mxu0 0
    %1423 = vmatpush1.bf16.msra.mxu0 0
    %1424 = vmatprep.subr.bf16.mxu0 0
    %1425 = vmatpush1.bf16.msra.mxu0 0
    %1426 = vmatprep.subr.bf16.mxu0 0
    %1427 = vmatpush1.bf16.msra.mxu0 0
    %1428 = vmatprep.subr.bf16.mxu0 0
    %1429 = vmatpush1.bf16.msra.mxu0 0
    %1430 = vmatprep.subr.bf16.mxu0 0
    %1431 = vmatpush1.bf16.msra.mxu0 0
    %1432 = vmatprep.subr.bf16.mxu0 0
    %1433 = vmatpush1.bf16.msra.mxu0 0
    %1434 = vmatprep.mubr.bf16.mxu0 0
    %1435 = vmatmul.mubr.bf16.gmra.mrb[0].mxu0 %v1400
    %v1436 = vpop.f32.mrb[0].mxu0
    %v1437 = vadd.f32 %v1385, %v1436
    %v1438 = vpop.f32.mrb[0].mxu0
    %v1439 = vpop.f32.mrb[0].mxu0
    %v1440 = vadd.f32 %v1385, %v1439
    %v1441 = vpop.f32.mrb[0].mxu0
    %1442 = vdwg.mxu0
    %v1443 = vmul.f32 %v1437, 0.5
    %v1444 = vmul.f32 %v1440, 0.5
    %v1445 = vmul.f32 %v1437, 0.70710677
    %v1446 = vmul.f32 %v1440, 0.70710677
    %v1447 = verf.f32.pop %v1445
    %v1448 = verf.f32.pop %v1446
    %v1449 = vadd.f32 %v1447, 1.0
    %v1450 = vadd.f32 %v1448, 1.0
    %v1451 = vmul.f32 %v1443, %v1449
    %v1452 = vmul.f32 %v1444, %v1450
    %v1453 = vpack.c.bf16 %v1452, %v1451
    %v1454 = vld [vmem:[#allocation23] sm:$0xf]
    %v1455 = vld [vmem:[#allocation23 + $0x4] sm:$0xf]
    %v1456 = vld [vmem:[#allocation23 + $0x8] sm:$0xf]
    %v1457 = vld [vmem:[#allocation23 + $0xc] sm:$0xf]
    %v1458 = vld [vmem:[#allocation23 + $0x10] sm:$0xf]
    %v1459 = vld [vmem:[#allocation23 + $0x14] sm:$0xf]
    %v1460 = vld [vmem:[#allocation23 + $0x18] sm:$0xf]
    %v1461 = vld [vmem:[#allocation23 + $0x1c] sm:$0xf]
    %v1462 = vld [vmem:[#allocation23 + $0x20] sm:$0xf]
    %v1463 = vld [vmem:[#allocation23 + $0x24] sm:$0xf]
    %v1464 = vld [vmem:[#allocation23 + $0x28] sm:$0xf]
    %v1465 = vld [vmem:[#allocation23 + $0x2c] sm:$0xf]
    %v1466 = vld [vmem:[#allocation23 + $0x30] sm:$0xf]
    %v1467 = vld [vmem:[#allocation23 + $0x34] sm:$0xf]
    %v1468 = vld [vmem:[#allocation23 + $0x38] sm:$0xf]
    %v1469 = vld [vmem:[#allocation23 + $0x3c] sm:$0xf]
    %v1470 = vld [vmem:[#allocation25] sm:$0x1]
    %v1472 = vlaneseq
    %v1473 = vshrl.u32 %v1472, 7
    %v1474 = vsub.s32 0, %v1473
    %v1475 = vrot.slane %v1470, %v1474
    %v1493 = vunpack.c.l.b16 %v1454
    %v1494 = vunpack.c.l.b16 %v1455
    %v1495 = vunpack.c.l.b16 %v1456
    %v1496 = vunpack.c.l.b16 %v1457
    %v1497 = vunpack.c.l.b16 %v1458
    %v1498 = vunpack.c.l.b16 %v1459
    %v1499 = vunpack.c.l.b16 %v1460
    %v1500 = vunpack.c.l.b16 %v1461
    %v1501 = vunpack.c.l.b16 %v1462
    %v1502 = vunpack.c.l.b16 %v1463
    %v1503 = vunpack.c.l.b16 %v1464
    %v1504 = vunpack.c.l.b16 %v1465
    %v1505 = vunpack.c.l.b16 %v1466
    %v1506 = vunpack.c.l.b16 %v1467
    %v1507 = vunpack.c.l.b16 %v1468
    %v1508 = vunpack.c.l.b16 %v1469
    %v1509 = vpack.c.b16 %v1494, %v1493
    %v1510 = vpack.c.b16 %v1496, %v1495
    %v1511 = vpack.c.b16 %v1498, %v1497
    %v1512 = vpack.c.b16 %v1500, %v1499
    %v1513 = vpack.c.b16 %v1502, %v1501
    %v1514 = vpack.c.b16 %v1504, %v1503
    %v1515 = vpack.c.b16 %v1506, %v1505
    %v1516 = vpack.c.b16 %v1508, %v1507
    %1525 = vmatprep.subr.bf16.mxu0 0
    %1526 = vmatpush1.bf16.msra.mxu0 %v1509
    %1527 = vmatprep.subr.bf16.mxu0 0
    %1528 = vmatpush1.bf16.msra.mxu0 %v1510
    %1529 = vmatprep.subr.bf16.mxu0 0
    %1530 = vmatpush1.bf16.msra.mxu0 %v1511
    %1531 = vmatprep.subr.bf16.mxu0 0
    %1532 = vmatpush1.bf16.msra.mxu0 %v1512
    %1533 = vmatprep.subr.bf16.mxu0 0
    %1534 = vmatpush1.bf16.msra.mxu0 %v1513
    %1535 = vmatprep.subr.bf16.mxu0 0
    %1536 = vmatpush1.bf16.msra.mxu0 %v1514
    %1537 = vmatprep.subr.bf16.mxu0 0
    %1538 = vmatpush1.bf16.msra.mxu0 %v1515
    %1539 = vmatprep.subr.bf16.mxu0 0
    %1540 = vmatpush1.bf16.msra.mxu0 %v1516
    %1541 = vmatprep.subr.bf16.mxu0 0
    %1542 = vmatpush1.bf16.msra.mxu0 0
    %1543 = vmatprep.subr.bf16.mxu0 0
    %1544 = vmatpush1.bf16.msra.mxu0 0
    %1545 = vmatprep.subr.bf16.mxu0 0
    %1546 = vmatpush1.bf16.msra.mxu0 0
    %1547 = vmatprep.subr.bf16.mxu0 0
    %1548 = vmatpush1.bf16.msra.mxu0 0
    %1549 = vmatprep.subr.bf16.mxu0 0
    %1550 = vmatpush1.bf16.msra.mxu0 0
    %1551 = vmatprep.subr.bf16.mxu0 0
    %1552 = vmatpush1.bf16.msra.mxu0 0
    %1553 = vmatprep.subr.bf16.mxu0 0
    %1554 = vmatpush1.bf16.msra.mxu0 0
    %1555 = vmatprep.subr.bf16.mxu0 0
    %1556 = vmatpush1.bf16.msra.mxu0 0
    %1557 = vmatprep.mubr.bf16.mxu0 0
    %1558 = vmatmul.mubr.bf16.gmra.mrb[0].mxu0 %v1453
    %v1559 = vpop.f32.mrb[0].mxu0
    %v1560 = vadd.f32 %v1475, %v1559
    %v1561 = vpop.f32.mrb[0].mxu0
    %v1562 = vpop.f32.mrb[0].mxu0
    %v1563 = vadd.f32 %v1475, %v1562
    %v1564 = vpop.f32.mrb[0].mxu0
    %1565 = vdwg.mxu0
    %1566 = vst.msk [vmem:[#allocation27] sm:$0xff] %vm253, %v1560
    %1567 = vst.msk [vmem:[#allocation27 + $0x8] sm:$0xff] %vm253, %v1563
    // Predicated region
    $region122: #{tpu_custom_call.1} parent=1 // pred_check
      _
    $region123: #{tpu_custom_call.1} parent=1 // pred_check_branch
      %1569 = sbr.rel (0) target = $region125
    $region124: #{tpu_custom_call.1} parent=1 // pred_region
      %s1571 = ssub.s32 256, 256
      %1572 = vsyncadd [#allocation4], %s1571
      %s1573 = sshll.u32 [#allocation26], 4
      %s1574 = int_to_ptr.vmem [resolvable:$true] %s1573
      %1579 = dma.vmem_to_hbm [thread:$0]  %s1574, 256, %s15, [#allocation4], 128, 128, 8
    $region125: #{tpu_custom_call.1} parent=1 // pred_fallthru
      _
    // Predicated region
    $region126: #{tpu_custom_call.1} parent=1 // pred_check
      _
    $region127: #{tpu_custom_call.1} parent=1 // pred_check_branch
      %1581 = sbr.rel (0) target = $region129
    $region128: #{tpu_custom_call.1} parent=1 // pred_region
      %s1583 = ssub.s32 256, 256
      %1584 = vsyncadd [#allocation28], %s1583
      %s1585 = sshll.u32 [#allocation27], 4
      %s1586 = int_to_ptr.vmem [resolvable:$true] %s1585
      %1591 = dma.vmem_to_hbm [thread:$0]  %s1586, 256, %s16, [#allocation28], 128, 128, 8
    $region129: #{tpu_custom_call.1} parent=1 // pred_fallthru
      _
    // Predicated region
    $region130: #{tpu_custom_call.1} parent=1 // pred_check
      _
    $region131: #{tpu_custom_call.1} parent=1 // pred_check_branch
      %1593 = sbr.rel (0) target = $region133
    $region132: #{tpu_custom_call.1} parent=1 // pred_region
      %s1595 = ssub.s32 256, 256
      %1596 = vsyncadd [#allocation28], %s1595
      %s1597 = sshll.u32 [#allocation29], 4
      %s1598 = int_to_ptr.vmem [resolvable:$true] %s1597
      %1603 = dma.vmem_to_hbm [thread:$0]  %s1598, 256, %s17, [#allocation28], 128, 128, 8
    $region133: #{tpu_custom_call.1} parent=1 // pred_fallthru
      _
    // Predicated region
    $region134: #{tpu_custom_call.1} parent=1 // pred_check
      _
    $region135: #{tpu_custom_call.1} parent=1 // pred_check_branch
      %1605 = sbr.rel (0) target = $region137
    $region136: #{tpu_custom_call.1} parent=1 // pred_region
      %1606 = dma.done [#allocation4], 256
    $region137: #{tpu_custom_call.1} parent=1 // pred_fallthru
      _
    // Predicated region
    $region138: #{tpu_custom_call.1} parent=1 // pred_check
      _
    $region139: #{tpu_custom_call.1} parent=1 // pred_check_branch
      %1608 = sbr.rel (0) target = $region141
    $region140: #{tpu_custom_call.1} parent=1 // pred_region
      %1609 = dma.done [#allocation28], 256
    $region141: #{tpu_custom_call.1} parent=1 // pred_fallthru
      _
    // Predicated region
    $region142: #{tpu_custom_call.1} parent=1 // pred_check
      _
    $region143: #{tpu_custom_call.1} parent=1 // pred_check_branch
      %1611 = sbr.rel (0) target = $region145
    $region144: #{tpu_custom_call.1} parent=1 // pred_region
      %1612 = dma.done [#allocation28], 256
    $region145: #{tpu_custom_call.1} parent=1 // pred_fallthru
      _
    %1613 = vsyncpa [#allocation3], 1
    %1614 = vsyncpa [#allocation6], 1
    %1615 = vsyncpa [#allocation9], 1
    %1616 = vsyncpa [#allocation12], 1
    %1617 = vsyncpa [#allocation15], 1
    %1618 = vsyncpa [#allocation18], 1
    %1619 = vsyncpa [#allocation21], 1
    %1620 = vsyncpa [#allocation24], 1
    %1621 = vsyncpa [#allocation4], 1
    %1622 = vsyncpa [#allocation28], 1

</llo_original>
